<compile_context>
chip_gen: v5e
topology: v5e:2x2
jax: 0.10.0
libtpu: 0.0.40
codegen_flags: <defaults>
</compile_context>

<pallas_src>
import jax
import jax.numpy as jnp
from jax import lax
from jax.experimental import pallas as pl
from jax.experimental.pallas import tpu as pltpu

C = 128                 # fixed channel width from the module
NUM_CLASSES = 2
BN_EPS = 1e-5


def _round_up(x, m):
    return ((x + m - 1) // m) * m


def _vmem_budget_bytes():
    """Per-generation VMEM budget (~40 MiB on v7x, ~80 MiB on v5e/v6e)."""
    try:
        cap = int(pltpu.get_tpu_info().vmem_capacity_bytes)
    except Exception:
        cap = 64 * 1024 * 1024              # conservative fallback (v7x-sized)
    budget = min(cap // 2 + cap // 8, 80 * 1024 * 1024)
    return max(budget, 16 * 1024 * 1024)


def _pick_batch_block(n, t_pad, vmem_budget):
    """Largest batch block that fits the VMEM budget, keeping >=2 grid steps."""
    in_bytes = t_pad * C * 2 * 2              # bf16 input rows, double-buffered
    out_bytes = 2 * 128 * 128 * 4 * 2         # f32 sum/sumsq planes, 2 buffers
    live_bytes = t_pad * C * 4 * 8            # conv temporaries (upper bound)
    per_sample = in_bytes + out_bytes + live_bytes
    fixed = 2 * (11 * C * C * 2) + (2 << 20)  # packed weights (2 bufs) + slack
    cap = max(1, (vmem_budget - fixed) // per_sample)
    if n >= 8:
        target_steps = 8                      # DMA pipeline depth + megacore
    elif n >= 2:
        target_steps = 2                      # both v7x TensorCores get work
    else:
        target_steps = 1
    b = min(int(cap), max(1, -(-n // target_steps)), 32)
    return max(1, b)


# --------------------------------------------------------------------------
# Kernel 1: BN-folded dilated TDNN stack (channels-last, batch flattened along
# time) with the statistics-pooling accumulation fused into the epilogue.
# --------------------------------------------------------------------------
def tdnn_pool_forward(x_flat, w_all, vec_rows, *, n_blocks, b_blk, Tp, T,
                      vmem_limit):
    T3 = T - 14
    rows = b_blk * Tp
    L1 = rows - 4
    L2 = rows - 8
    L3 = rows - 14
    n_chunks = -(-T3 // 128)

    def kernel(x_ref, w_ref, vec_ref, out_ref):
        b1 = vec_ref[0:1, :]
        b2 = vec_ref[1:2, :]
        b3 = vec_ref[2:3, :]
        s3 = vec_ref[3:4, :]
        h3 = vec_ref[4:5, :]

        # Conv1d(k=5, d=1) + ReLU, BN0 folded in.  Tap pairs fused to K=256.
        a01 = jnp.concatenate([x_ref[0:L1, :], x_ref[1:1 + L1, :]], axis=1)
        a23 = jnp.concatenate([x_ref[2:2 + L1, :], x_ref[3:3 + L1, :]], axis=1)
        h = jnp.dot(a01, w_ref[0:256, :], preferred_element_type=jnp.float32)
        h = h + jnp.dot(a23, w_ref[256:512, :],
                        preferred_element_type=jnp.float32)
        h = h + jnp.dot(x_ref[4:4 + L1, :], w_ref[512:640, :],
                        preferred_element_type=jnp.float32)
        h = jnp.maximum(h + b1, 0.0).astype(jnp.bfloat16)          # (L1, 128)

        # Conv1d(k=3, d=2) + ReLU, BN1 folded in (input offsets 0, 2, 4).
        a02 = jnp.concatenate([h[0:L2, :], h[2:2 + L2, :]], axis=1)
        g = jnp.dot(a02, w_ref[640:896, :], preferred_element_type=jnp.float32)
        g = g + jnp.dot(h[4:4 + L2, :], w_ref[896:1024, :],
                        preferred_element_type=jnp.float32)
        g = jnp.maximum(g + b2, 0.0).astype(jnp.bfloat16)          # (L2, 128)

        # Conv1d(k=3, d=3) + ReLU, BN2 folded in (offsets 0, 3, 6), then BN3.
        a03 = jnp.concatenate([g[0:L3, :], g[3:3 + L3, :]], axis=1)
        f = jnp.dot(a03, w_ref[1024:1280, :],
                    preferred_element_type=jnp.float32)
        f = f + jnp.dot(g[6:6 + L3, :], w_ref[1280:1408, :],
                        preferred_element_type=jnp.float32)
        f = jnp.maximum(f + b3, 0.0)
        f = f * s3 + h3                                            # (L3, 128)

        # Fused statistics-pooling accumulation.  Sample n occupies rows
        # [n*Tp, n*Tp+T3) of f; rows past T3 (cross-sample mixes / padding)
        # are never read.  Buckets are indexed by (t mod 128); the per-channel
        # cyclic fold to the module's scrambled columns happens in the wrapper.
        for n in range(b_blk):              # tiny epilogue: slices + stores
            base = n * Tp
            for m in range(n_chunks):
                lo = m * 128
                sz = min(128, T3 - lo)
                c = f[base + lo:base + lo + sz, :]
                if m == 0:
                    out_ref[n, 0, 0:sz, :] = c
                    out_ref[n, 1, 0:sz, :] = c * c
                    if sz < 128:
                        zpad = jnp.zeros((128 - sz, C), jnp.float32)
                        out_ref[n, 0, sz:128, :] = zpad
                        out_ref[n, 1, sz:128, :] = zpad
                else:
                    out_ref[n, 0, 0:sz, :] = out_ref[n, 0, 0:sz, :] + c
                    out_ref[n, 1, 0:sz, :] = out_ref[n, 1, 0:sz, :] + c * c

    return pl.pallas_call(
        kernel,
        out_shape=jax.ShapeDtypeStruct((n_blocks * b_blk, 2, 128, 128),
                                       jnp.float32),
        grid=(n_blocks,),
        in_specs=[
            pl.BlockSpec((rows, C), lambda i: (i, 0)),
            pl.BlockSpec((11 * C, C), lambda i: (0, 0)),
            pl.BlockSpec((8, C), lambda i: (0, 0)),
        ],
        out_specs=pl.BlockSpec((b_blk, 2, 128, 128), lambda i: (i, 0, 0, 0)),
        compiler_params=pltpu.CompilerParams(
            dimension_semantics=("parallel",),
            vmem_limit_bytes=vmem_limit),
    )(x_flat, w_all, vec_rows)


# --------------------------------------------------------------------------
# Kernel 2: MLP head on (sum, sum-of-squares) rows + masked log_softmax.
# --------------------------------------------------------------------------
def head_forward(S, S2, wm, ws, w2p, w3p, vec_row, *, T3, vmem_limit):
    Np = S.shape[0]
    hb = Np if Np <= 256 else 256             # single grid step for small N
    Nh = _round_up(Np, hb)
    if Nh != Np:
        pad = ((0, Nh - Np), (0, 0))
        S = jnp.pad(S, pad)
        S2 = jnp.pad(S2, pad)
    inv_t = 1.0 / T3
    inv_tm1 = 1.0 / (T3 - 1)

    def kernel(s_ref, s2_ref, wm_ref, ws_ref, w2_ref, w3_ref, vec_ref, o_ref):
        s = s_ref[...]
        s2 = s2_ref[...]
        mean = s * inv_t
        var = jnp.maximum(s2 - s * mean, 0.0) * inv_tm1   # unbiased torch.std
        std = jnp.sqrt(var)

        fc1_b = vec_ref[0:1, :]
        c1_s, c1_h = vec_ref[1:2, :], vec_ref[2:3, :]
        fc2_b = vec_ref[3:4, :]
        c2_s, c2_h = vec_ref[4:5, :], vec_ref[5:6, :]
        fc3_b = vec_ref[6:7, :]

        # Linear(256->128) on concat([mean, std]) == mean@Wm + std@Ws.
        h = (jnp.dot(mean, wm_ref[...], preferred_element_type=jnp.float32)
             + jnp.dot(std, ws_ref[...], preferred_element_type=jnp.float32)
             + fc1_b)
        h = jnp.maximum(h, 0.0) * c1_s + c1_h
        h = jnp.dot(h, w2_ref[...], preferred_element_type=jnp.float32) + fc2_b
        h = jnp.maximum(h, 0.0) * c2_s + c2_h
        logits = (jnp.dot(h, w3_ref[...], preferred_element_type=jnp.float32)
                  + fc3_b)

        # log_softmax over the first NUM_CLASSES lanes (rest is zero padding).
        lane = lax.broadcasted_iota(jnp.int32, logits.shape, 1)
        valid = lane < NUM_CLASSES
        masked = jnp.where(valid, logits, -1e30)
        mx = jnp.max(masked, axis=-1, keepdims=True)
        e = jnp.where(valid, jnp.exp(masked - mx), 0.0)
        lse = jnp.log(jnp.sum(e, axis=-1, keepdims=True)) + mx
        o_ref[...] = jnp.where(valid, logits - lse, 0.0)

    return pl.pallas_call(
        kernel,
        out_shape=jax.ShapeDtypeStruct((Nh, 128), jnp.float32),
        grid=(Nh // hb,),
        in_specs=[
            pl.BlockSpec((hb, C), lambda i: (i, 0)),
            pl.BlockSpec((hb, C), lambda i: (i, 0)),
            pl.BlockSpec((C, 128), lambda i: (0, 0)),
            pl.BlockSpec((C, 128), lambda i: (0, 0)),
            pl.BlockSpec((128, 128), lambda i: (0, 0)),
            pl.BlockSpec((128, 128), lambda i: (0, 0)),
            pl.BlockSpec((8, 128), lambda i: (0, 0)),
        ],
        out_specs=pl.BlockSpec((hb, 128), lambda i: (i, 0)),
        compiler_params=pltpu.CompilerParams(
            dimension_semantics=("parallel",),
            vmem_limit_bytes=min(vmem_limit, 32 * 1024 * 1024)),
    )(S, S2, wm, ws, w2p, w3p, vec_row)


# --------------------------------------------------------------------------
# Parameter construction (deterministic, synthetic) and kernel-side packing.
# --------------------------------------------------------------------------
def fold_bn(gamma, beta, mean, var):
    scale = gamma / jnp.sqrt(var + BN_EPS)
    shift = beta - mean * scale
    return scale, shift


def make_params(key):
    ks = list(jax.random.split(key, 40))
    nk = lambda: ks.pop()
    nrm = lambda shape, s: jax.random.normal(nk(), shape, jnp.float32) * s

    def bn_params(n):
        gamma = 1.0 + 0.1 * jax.random.normal(nk(), (n,), jnp.float32)
        beta = 0.1 * jax.random.normal(nk(), (n,), jnp.float32)
        rmean = 0.1 * jax.random.normal(nk(), (n,), jnp.float32)
        rvar = 1.0 + 0.2 * jax.random.uniform(nk(), (n,), jnp.float32)
        return fold_bn(gamma, beta, rmean, rvar)

    p = {}
    p['bn0_scale'], p['bn0_shift'] = bn_params(C)
    p['w1_oik'] = nrm((C, C, 5), 0.04); p['b1'] = nrm((C,), 0.02)
    p['bn1_scale'], p['bn1_shift'] = bn_params(C)
    p['w2_oik'] = nrm((C, C, 3), 0.05); p['b2'] = nrm((C,), 0.02)
    p['bn2_scale'], p['bn2_shift'] = bn_params(C)
    p['w3_oik'] = nrm((C, C, 3), 0.05); p['b3'] = nrm((C,), 0.02)
    p['bn3_scale'], p['bn3_shift'] = bn_params(C)
    p['fc1_w'] = nrm((128, 256), 0.05); p['fc1_b'] = nrm((128,), 0.02)
    p['c1_scale'], p['c1_shift'] = bn_params(128)
    p['fc2_w'] = nrm((64, 128), 0.08); p['fc2_b'] = nrm((64,), 0.02)
    p['c2_scale'], p['c2_shift'] = bn_params(64)
    p['fc3_w'] = nrm((2, 64), 0.1); p['fc3_b'] = nrm((2,), 0.02)
    return p


def prepare_kernel_params(p):
    """Fold BN0/1/2 into the conv weights, pack per-tap (in,out) matrices."""
    def fold_into_conv(w_oik, b_o, s_in, h_in):
        w_f = w_oik * s_in[None, :, None]
        b_f = b_o + jnp.einsum('oik,i->o', w_oik, h_in)
        return w_f, b_f

    w1f, b1f = fold_into_conv(p['w1_oik'], p['b1'], p['bn0_scale'], p['bn0_shift'])
    w2f, b2f = fold_into_conv(p['w2_oik'], p['b2'], p['bn1_scale'], p['bn1_shift'])
    w3f, b3f = fold_into_conv(p['w3_oik'], p['b3'], p['bn2_scale'], p['bn2_shift'])

    def taps(w_f):                           # (O, I, K) -> K matrices of (I, O)
        return [jnp.transpose(w_f[:, :, k], (1, 0)) for k in range(w_f.shape[2])]

    # Row layout must match the kernel's static slices:
    #   [0:256)=w1 taps0,1  [256:512)=w1 taps2,3  [512:640)=w1 tap4
    #   [640:896)=w2 taps0,1  [896:1024)=w2 tap2
    #   [1024:1280)=w3 taps0,1  [1280:1408)=w3 tap2
    w_all = jnp.concatenate(taps(w1f) + taps(w2f) + taps(w3f),
                            axis=0).astype(jnp.bfloat16)          # (1408, 128)

    zc = jnp.zeros((C,), jnp.float32)
    vec_rows = jnp.stack([b1f, b2f, b3f, p['bn3_scale'], p['bn3_shift'],
                          zc, zc, zc], axis=0)                    # (8, 128)

    # Head: lane-pad fc2/fc3 so all dots & stores are 128-lane dense.
    w1t = p['fc1_w'].T                                            # (256, 128)

    def pad128(v):
        return jnp.zeros((128,), jnp.float32).at[:v.shape[0]].set(v)

    return {
        'w_all': w_all,
        'vec_rows': vec_rows,
        'w_mean': w1t[:C],
        'w_std': w1t[C:],
        'w2p': jnp.zeros((128, 128), jnp.float32).at[:, :64].set(p['fc2_w'].T),
        'w3p': jnp.zeros((128, 128), jnp.float32)
               .at[:64, :NUM_CLASSES].set(p['fc3_w'].T),
        'vec_row': jnp.stack(
            [p['fc1_b'], p['c1_scale'], p['c1_shift'],
             pad128(p['fc2_b']), pad128(p['c2_scale']), pad128(p['c2_shift']),
             pad128(p['fc3_b']), jnp.zeros((128,), jnp.float32)], axis=0),
    }


def pallas_model_forward(x_nct, p, return_stats=False):
    N, Cin, T = x_nct.shape
    assert Cin == C
    assert T >= 16, "need T >= 16 so T3 = T - 14 >= 2 (unbiased std is defined)"
    T3 = T - 14

    kp = prepare_kernel_params(p)
    budget = _vmem_budget_bytes()
    Tp = _round_up(T, 16)
    b_blk = _pick_batch_block(N, Tp, budget)
    Np = _round_up(N, b_blk)
    n_blocks = Np // b_blk

    # GradReverse: identity in forward.  Cast to bf16 + channels-last + pad in
    # one XLA pass (the bf16 copy has to be written anyway), then a free
    # leading-dim reshape so each grid block is a 2D lane-dense slab.
    x_tc = jnp.transpose(x_nct, (0, 2, 1)).astype(jnp.bfloat16)
    x_tc = jnp.pad(x_tc, ((0, Np - N), (0, Tp - T), (0, 0)))
    x_flat = x_tc.reshape(Np * Tp, C)

    sums = tdnn_pool_forward(x_flat, kp['w_all'], kp['vec_rows'],
                             n_blocks=n_blocks, b_blk=b_blk, Tp=Tp, T=T,
                             vmem_limit=budget)       # (Np, 2, 128, 128) f32

    # Fold the (t mod 128, channel) buckets into the per-column sums of the
    # module's scrambled (N, T3, C) view: column c collects flat indices
    # j == c (mod 128) of the channels-first activation, i.e. bucket
    # (c - ch*T3) mod 128 of channel ch.  Fixed-size, T-independent XLA gather.
    ch = jnp.arange(C, dtype=jnp.int32)
    col = jnp.arange(C, dtype=jnp.int32)
    rho = (col[None, :] - ch[:, None] * T3) % C        # (ch, col)
    chi = jnp.broadcast_to(ch[:, None], (C, C))
    S = sums[:, 0][:, rho, chi].sum(axis=1)            # (Np, 128) group sums
    S2 = sums[:, 1][:, rho, chi].sum(axis=1)           # (Np, 128) group sumsq

    logp_pad = head_forward(S, S2, kp['w_mean'], kp['w_std'], kp['w2p'],
                            kp['w3p'], kp['vec_row'], T3=T3, vmem_limit=budget)
    logp = logp_pad[:N, :NUM_CLASSES]
    if not return_stats:
        return logp
    mean = S / T3
    var = jnp.maximum(S2 - S * mean, 0.0) / (T3 - 1)
    stats = jnp.concatenate([mean, jnp.sqrt(var)], axis=-1)[:N]
    return logp, stats


# --------------------------------------------------------------------------
# Pure-JAX reference (f32, PyTorch-faithful, eval-mode BN) for validation.
# --------------------------------------------------------------------------
def head_reference(stats, p):
    dot = lambda a, b: jnp.dot(a, b, precision=lax.Precision.HIGHEST)
    h = jnp.maximum(dot(stats, p['fc1_w'].T) + p['fc1_b'], 0.0)
    h = h * p['c1_scale'] + p['c1_shift']
    h = jnp.maximum(dot(h, p['fc2_w'].T) + p['fc2_b'], 0.0)
    h = h * p['c2_scale'] + p['c2_shift']
    logits = dot(h, p['fc3_w'].T) + p['fc3_b']
    return jax.nn.log_softmax(logits, axis=1)


def reference_forward(x_nct, p):
    def bn(x, sc, sh):
        return x * sc[None, :, None] + sh[None, :, None]

    def conv(x, w, b, d):
        y = lax.conv_general_dilated(x, w, (1,), 'VALID', rhs_dilation=(d,),
                                     dimension_numbers=('NCH', 'OIH', 'NCH'),
                                     precision=lax.Precision.HIGHEST)
        return y + b[None, :, None]

    x = bn(x_nct, p['bn0_scale'], p['bn0_shift'])
    x = bn(jnp.maximum(conv(x, p['w1_oik'], p['b1'], 1), 0),
           p['bn1_scale'], p['bn1_shift'])
    x = bn(jnp.maximum(conv(x, p['w2_oik'], p['b2'], 2), 0),
           p['bn2_scale'], p['bn2_shift'])
    x = bn(jnp.maximum(conv(x, p['w3_oik'], p['b3'], 3), 0),
           p['bn3_scale'], p['bn3_shift'])

    N, _, T3 = x.shape
    z = x.reshape(N, T3, C)                              # raw reshape, as torch
    mean = z.mean(axis=1)
    std = jnp.sqrt(((z - mean[:, None, :]) ** 2).sum(axis=1) / (T3 - 1))
    stats = jnp.concatenate([mean, std], axis=-1)
    return head_reference(stats, p), stats


def _check(name, a, b, atol, rtol):
    if a.shape != b.shape or not bool(jnp.allclose(a, b, atol=atol, rtol=rtol)):
        diff = float(jnp.max(jnp.abs(a - b)))
        raise AssertionError(f"{name} mismatch: max|diff|={diff:.4e}")


if __name__ == "__main__":
    key = jax.random.PRNGKey(0)
    kx, kp_key = jax.random.split(key)

    N, T = 2, 30                                   # T3 = 16 after the TDNN stack
    x = jax.random.normal(kx, (N, C, T), jnp.float32)    # NCT, like PyTorch Conv1d
    params = make_params(kp_key)

    fwd = jax.jit(pallas_model_forward, static_argnames=("return_stats",))
    logp, stats = fwd(x, params, return_stats=True)
    logp = jax.block_until_ready(logp)
    stats = jax.block_until_ready(stats)

    ref_logp, ref_stats = reference_forward(x, params)

    assert logp.shape == (N, NUM_CLASSES)
    # Conv stack + scramble + pooling (bf16 matmul operands -> loose tolerance).
    _check("pooled stats", stats, ref_stats, atol=6e-2, rtol=6e-2)
    # f32 head on the kernel's own stats must match the reference head tightly.
    _check("head on kernel stats", logp, head_reference(stats, params),
           atol=2e-2, rtol=2e-2)
    # End-to-end sanity.
    _check("log-probs", logp, ref_logp, atol=1e-1, rtol=1e-1)

    print("KERNEL_OK")
</pallas_src>

<mosaic_0001>
module attributes {stable_mosaic.version = 11 : i64} {
  func.func @kernel(%arg0: i32, %arg1: memref<32x128xbf16, #tpu.memory_space<vmem>>, %arg2: memref<1408x128xbf16, #tpu.memory_space<vmem>>, %arg3: memref<8x128xf32, #tpu.memory_space<vmem>>, %arg4: memref<1x2x128x128xf32, #tpu.memory_space<vmem>>) attributes {dimension_semantics = [#tpu.dimension_semantics<parallel>], iteration_bounds = array<i64: 2>, scalar_prefetch = 0 : i64, scratch_operands = 0 : i64, tpu.core_type = #tpu.core_type<tc>, window_params = [{transform_indices = @transform_0, window_bounds = array<i64: 32, 128>}, {pipeline_mode = #tpu.pipeline_mode<synchronous>, transform_indices = @transform_1, window_bounds = array<i64: 1408, 128>}, {pipeline_mode = #tpu.pipeline_mode<synchronous>, transform_indices = @transform_2, window_bounds = array<i64: 8, 128>}, {transform_indices = @transform_3, window_bounds = array<i64: 1, 2, 128, 128>}]} {
    %c0 = arith.constant 0 : index
    %c0_0 = arith.constant 0 : index
    %0 = vector.load %arg3[%c0, %c0_0] : memref<8x128xf32, #tpu.memory_space<vmem>>, vector<1x128xf32>
    %c1 = arith.constant 1 : index
    %c0_1 = arith.constant 0 : index
    %1 = vector.load %arg3[%c1, %c0_1] : memref<8x128xf32, #tpu.memory_space<vmem>>, vector<1x128xf32>
    %c2 = arith.constant 2 : index
    %c0_2 = arith.constant 0 : index
    %2 = vector.load %arg3[%c2, %c0_2] : memref<8x128xf32, #tpu.memory_space<vmem>>, vector<1x128xf32>
    %c3 = arith.constant 3 : index
    %c0_3 = arith.constant 0 : index
    %3 = vector.load %arg3[%c3, %c0_3] : memref<8x128xf32, #tpu.memory_space<vmem>>, vector<1x128xf32>
    %c4 = arith.constant 4 : index
    %c0_4 = arith.constant 0 : index
    %4 = vector.load %arg3[%c4, %c0_4] : memref<8x128xf32, #tpu.memory_space<vmem>>, vector<1x128xf32>
    %c0_5 = arith.constant 0 : index
    %c0_6 = arith.constant 0 : index
    %5 = vector.load %arg1[%c0_5, %c0_6] : memref<32x128xbf16, #tpu.memory_space<vmem>>, vector<28x128xbf16>
    %c1_7 = arith.constant 1 : index
    %c0_8 = arith.constant 0 : index
    %6 = vector.load %arg1[%c1_7, %c0_8] : memref<32x128xbf16, #tpu.memory_space<vmem>>, vector<28x128xbf16>
    %7 = tpu.concatenate %5, %6 in 1 : vector<28x128xbf16>, vector<28x128xbf16> -> vector<28x256xbf16>
    %c2_9 = arith.constant 2 : index
    %c0_10 = arith.constant 0 : index
    %8 = vector.load %arg1[%c2_9, %c0_10] : memref<32x128xbf16, #tpu.memory_space<vmem>>, vector<28x128xbf16>
    %c3_11 = arith.constant 3 : index
    %c0_12 = arith.constant 0 : index
    %9 = vector.load %arg1[%c3_11, %c0_12] : memref<32x128xbf16, #tpu.memory_space<vmem>>, vector<28x128xbf16>
    %10 = tpu.concatenate %8, %9 in 1 : vector<28x128xbf16>, vector<28x128xbf16> -> vector<28x256xbf16>
    %c0_13 = arith.constant 0 : index
    %c0_14 = arith.constant 0 : index
    %11 = vector.load %arg2[%c0_13, %c0_14] : memref<1408x128xbf16, #tpu.memory_space<vmem>>, vector<256x128xbf16>
    %cst = arith.constant dense<0.000000e+00> : vector<28x128xf32>
    %12 = tpu.matmul %7, %11, %cst {dimension_numbers = #tpu.dot_dimension_numbers<[1], [0], [0], [1], [0, 0, 1, 1], [], []>} : vector<28x256xbf16>, vector<256x128xbf16>, vector<28x128xf32> -> vector<28x128xf32>
    %c256 = arith.constant 256 : index
    %c0_15 = arith.constant 0 : index
    %13 = vector.load %arg2[%c256, %c0_15] : memref<1408x128xbf16, #tpu.memory_space<vmem>>, vector<256x128xbf16>
    %cst_16 = arith.constant dense<0.000000e+00> : vector<28x128xf32>
    %14 = tpu.matmul %10, %13, %cst_16 {dimension_numbers = #tpu.dot_dimension_numbers<[1], [0], [0], [1], [0, 0, 1, 1], [], []>} : vector<28x256xbf16>, vector<256x128xbf16>, vector<28x128xf32> -> vector<28x128xf32>
    %15 = arith.addf %12, %14 : vector<28x128xf32>
    %c4_17 = arith.constant 4 : index
    %c0_18 = arith.constant 0 : index
    %16 = vector.load %arg1[%c4_17, %c0_18] : memref<32x128xbf16, #tpu.memory_space<vmem>>, vector<28x128xbf16>
    %c512 = arith.constant 512 : index
    %c0_19 = arith.constant 0 : index
    %17 = vector.load %arg2[%c512, %c0_19] : memref<1408x128xbf16, #tpu.memory_space<vmem>>, vector<128x128xbf16>
    %cst_20 = arith.constant dense<0.000000e+00> : vector<28x128xf32>
    %18 = tpu.matmul %16, %17, %cst_20 {dimension_numbers = #tpu.dot_dimension_numbers<[1], [0], [0], [1], [0, 0, 1, 1], [], []>} : vector<28x128xbf16>, vector<128x128xbf16>, vector<28x128xf32> -> vector<28x128xf32>
    %19 = arith.addf %15, %18 : vector<28x128xf32>
    %20 = vector.broadcast %0 : vector<1x128xf32> to vector<28x128xf32>
    %21 = arith.addf %19, %20 : vector<28x128xf32>
    %cst_21 = arith.constant 0.000000e+00 : f32
    %22 = vector.broadcast %cst_21 : f32 to vector<28x128xf32>
    %23 = arith.maximumf %21, %22 : vector<28x128xf32>
    %24 = arith.truncf %23 : vector<28x128xf32> to vector<28x128xbf16>
    %25 = vector.extract_strided_slice %24 {offsets = [0, 0], sizes = [24, 128], strides = [1, 1]} : vector<28x128xbf16> to vector<24x128xbf16>
    %26 = vector.extract_strided_slice %24 {offsets = [2, 0], sizes = [24, 128], strides = [1, 1]} : vector<28x128xbf16> to vector<24x128xbf16>
    %27 = tpu.concatenate %25, %26 in 1 : vector<24x128xbf16>, vector<24x128xbf16> -> vector<24x256xbf16>
    %c640 = arith.constant 640 : index
    %c0_22 = arith.constant 0 : index
    %28 = vector.load %arg2[%c640, %c0_22] : memref<1408x128xbf16, #tpu.memory_space<vmem>>, vector<256x128xbf16>
    %cst_23 = arith.constant dense<0.000000e+00> : vector<24x128xf32>
    %29 = tpu.matmul %27, %28, %cst_23 {dimension_numbers = #tpu.dot_dimension_numbers<[1], [0], [0], [1], [0, 0, 1, 1], [], []>} : vector<24x256xbf16>, vector<256x128xbf16>, vector<24x128xf32> -> vector<24x128xf32>
    %30 = vector.extract_strided_slice %24 {offsets = [4, 0], sizes = [24, 128], strides = [1, 1]} : vector<28x128xbf16> to vector<24x128xbf16>
    %c896 = arith.constant 896 : index
    %c0_24 = arith.constant 0 : index
    %31 = vector.load %arg2[%c896, %c0_24] : memref<1408x128xbf16, #tpu.memory_space<vmem>>, vector<128x128xbf16>
    %cst_25 = arith.constant dense<0.000000e+00> : vector<24x128xf32>
    %32 = tpu.matmul %30, %31, %cst_25 {dimension_numbers = #tpu.dot_dimension_numbers<[1], [0], [0], [1], [0, 0, 1, 1], [], []>} : vector<24x128xbf16>, vector<128x128xbf16>, vector<24x128xf32> -> vector<24x128xf32>
    %33 = arith.addf %29, %32 : vector<24x128xf32>
    %34 = vector.broadcast %1 : vector<1x128xf32> to vector<24x128xf32>
    %35 = arith.addf %33, %34 : vector<24x128xf32>
    %cst_26 = arith.constant 0.000000e+00 : f32
    %36 = vector.broadcast %cst_26 : f32 to vector<24x128xf32>
    %37 = arith.maximumf %35, %36 : vector<24x128xf32>
    %38 = arith.truncf %37 : vector<24x128xf32> to vector<24x128xbf16>
    %39 = vector.extract_strided_slice %38 {offsets = [0, 0], sizes = [18, 128], strides = [1, 1]} : vector<24x128xbf16> to vector<18x128xbf16>
    %40 = vector.extract_strided_slice %38 {offsets = [3, 0], sizes = [18, 128], strides = [1, 1]} : vector<24x128xbf16> to vector<18x128xbf16>
    %41 = tpu.concatenate %39, %40 in 1 : vector<18x128xbf16>, vector<18x128xbf16> -> vector<18x256xbf16>
    %c1024 = arith.constant 1024 : index
    %c0_27 = arith.constant 0 : index
    %42 = vector.load %arg2[%c1024, %c0_27] : memref<1408x128xbf16, #tpu.memory_space<vmem>>, vector<256x128xbf16>
    %cst_28 = arith.constant dense<0.000000e+00> : vector<18x128xf32>
    %43 = tpu.matmul %41, %42, %cst_28 {dimension_numbers = #tpu.dot_dimension_numbers<[1], [0], [0], [1], [0, 0, 1, 1], [], []>} : vector<18x256xbf16>, vector<256x128xbf16>, vector<18x128xf32> -> vector<18x128xf32>
    %44 = vector.extract_strided_slice %38 {offsets = [6, 0], sizes = [18, 128], strides = [1, 1]} : vector<24x128xbf16> to vector<18x128xbf16>
    %c1280 = arith.constant 1280 : index
    %c0_29 = arith.constant 0 : index
    %45 = vector.load %arg2[%c1280, %c0_29] : memref<1408x128xbf16, #tpu.memory_space<vmem>>, vector<128x128xbf16>
    %cst_30 = arith.constant dense<0.000000e+00> : vector<18x128xf32>
    %46 = tpu.matmul %44, %45, %cst_30 {dimension_numbers = #tpu.dot_dimension_numbers<[1], [0], [0], [1], [0, 0, 1, 1], [], []>} : vector<18x128xbf16>, vector<128x128xbf16>, vector<18x128xf32> -> vector<18x128xf32>
    %47 = arith.addf %43, %46 : vector<18x128xf32>
    %48 = vector.broadcast %2 : vector<1x128xf32> to vector<18x128xf32>
    %49 = arith.addf %47, %48 : vector<18x128xf32>
    %cst_31 = arith.constant 0.000000e+00 : f32
    %50 = vector.broadcast %cst_31 : f32 to vector<18x128xf32>
    %51 = arith.maximumf %49, %50 : vector<18x128xf32>
    %52 = vector.broadcast %3 : vector<1x128xf32> to vector<18x128xf32>
    %53 = arith.mulf %51, %52 : vector<18x128xf32>
    %54 = vector.broadcast %4 : vector<1x128xf32> to vector<18x128xf32>
    %55 = arith.addf %53, %54 : vector<18x128xf32>
    %56 = vector.extract_strided_slice %55 {offsets = [0, 0], sizes = [16, 128], strides = [1, 1]} : vector<18x128xf32> to vector<16x128xf32>
    %c0_32 = arith.constant 0 : index
    %c0_33 = arith.constant 0 : index
    %c0_34 = arith.constant 0 : index
    %c0_35 = arith.constant 0 : index
    %57 = vector.load %arg4[%c0_32, %c0_33, %c0_34, %c0_35] : memref<1x2x128x128xf32, #tpu.memory_space<vmem>>, vector<1x1x16x128xf32>
    %58 = vector.shape_cast %57 : vector<1x1x16x128xf32> to vector<16x128xf32>
    %59 = vector.shape_cast %56 : vector<16x128xf32> to vector<1x1x16x128xf32>
    tpu.vector_store %arg4[%c0_32, %c0_33, %c0_34, %c0_35], %59 {strides = array<i32>} : memref<1x2x128x128xf32, #tpu.memory_space<vmem>>, vector<1x1x16x128xf32>,
    %60 = arith.mulf %56, %56 : vector<16x128xf32>
    %c0_36 = arith.constant 0 : index
    %c1_37 = arith.constant 1 : index
    %c0_38 = arith.constant 0 : index
    %c0_39 = arith.constant 0 : index
    %61 = vector.load %arg4[%c0_36, %c1_37, %c0_38, %c0_39] : memref<1x2x128x128xf32, #tpu.memory_space<vmem>>, vector<1x1x16x128xf32>
    %62 = vector.shape_cast %61 : vector<1x1x16x128xf32> to vector<16x128xf32>
    %63 = vector.shape_cast %60 : vector<16x128xf32> to vector<1x1x16x128xf32>
    tpu.vector_store %arg4[%c0_36, %c1_37, %c0_38, %c0_39], %63 {strides = array<i32>} : memref<1x2x128x128xf32, #tpu.memory_space<vmem>>, vector<1x1x16x128xf32>,
    %cst_40 = arith.constant 0.000000e+00 : f32
    %64 = vector.broadcast %cst_40 : f32 to vector<112x128xf32>
    %c0_41 = arith.constant 0 : index
    %c0_42 = arith.constant 0 : index
    %c16 = arith.constant 16 : index
    %c0_43 = arith.constant 0 : index
    %65 = vector.load %arg4[%c0_41, %c0_42, %c16, %c0_43] : memref<1x2x128x128xf32, #tpu.memory_space<vmem>>, vector<1x1x112x128xf32>
    %66 = vector.shape_cast %65 : vector<1x1x112x128xf32> to vector<112x128xf32>
    %67 = vector.shape_cast %64 : vector<112x128xf32> to vector<1x1x112x128xf32>
    tpu.vector_store %arg4[%c0_41, %c0_42, %c16, %c0_43], %67 {strides = array<i32>} : memref<1x2x128x128xf32, #tpu.memory_space<vmem>>, vector<1x1x112x128xf32>,
    %c0_44 = arith.constant 0 : index
    %c1_45 = arith.constant 1 : index
    %c16_46 = arith.constant 16 : index
    %c0_47 = arith.constant 0 : index
    %68 = vector.load %arg4[%c0_44, %c1_45, %c16_46, %c0_47] : memref<1x2x128x128xf32, #tpu.memory_space<vmem>>, vector<1x1x112x128xf32>
    %69 = vector.shape_cast %68 : vector<1x1x112x128xf32> to vector<112x128xf32>
    %70 = vector.shape_cast %64 : vector<112x128xf32> to vector<1x1x112x128xf32>
    tpu.vector_store %arg4[%c0_44, %c1_45, %c16_46, %c0_47], %70 {strides = array<i32>} : memref<1x2x128x128xf32, #tpu.memory_space<vmem>>, vector<1x1x112x128xf32>,
    return
  }
  func.func @transform_0(%arg0: i32) -> (i32, i32) {
    %c0_i32 = arith.constant 0 : i32
    %c0_i32_0 = arith.constant 0 : i32
    return %arg0, %c0_i32 : i32, i32
  }
  func.func @transform_1(%arg0: i32) -> (i32, i32) {
    %c0_i32 = arith.constant 0 : i32
    %c0_i32_0 = arith.constant 0 : i32
    %c0_i32_1 = arith.constant 0 : i32
    return %c0_i32, %c0_i32_0 : i32, i32
  }
  func.func @transform_2(%arg0: i32) -> (i32, i32) {
    %c0_i32 = arith.constant 0 : i32
    %c0_i32_0 = arith.constant 0 : i32
    %c0_i32_1 = arith.constant 0 : i32
    return %c0_i32, %c0_i32_0 : i32, i32
  }
  func.func @transform_3(%arg0: i32) -> (i32, i32, i32, i32) {
    %c0_i32 = arith.constant 0 : i32
    %c0_i32_0 = arith.constant 0 : i32
    %c0_i32_1 = arith.constant 0 : i32
    %c0_i32_2 = arith.constant 0 : i32
    return %arg0, %c0_i32, %c0_i32_0, %c0_i32_1 : i32, i32, i32, i32
  }
}

module attributes {stable_mosaic.version = 11 : i64} {
  func.func @kernel(%arg0: i32, %arg1: memref<2x128xf32, #tpu.memory_space<vmem>>, %arg2: memref<2x128xf32, #tpu.memory_space<vmem>>, %arg3: memref<128x128xf32, #tpu.memory_space<vmem>>, %arg4: memref<128x128xf32, #tpu.memory_space<vmem>>, %arg5: memref<128x128xf32, #tpu.memory_space<vmem>>, %arg6: memref<128x128xf32, #tpu.memory_space<vmem>>, %arg7: memref<8x128xf32, #tpu.memory_space<vmem>>, %arg8: memref<2x128xf32, #tpu.memory_space<vmem>>) attributes {dimension_semantics = [#tpu.dimension_semantics<parallel>], iteration_bounds = array<i64: 1>, scalar_prefetch = 0 : i64, scratch_operands = 0 : i64, tpu.core_type = #tpu.core_type<tc>, window_params = [{transform_indices = @transform_0, window_bounds = array<i64: 2, 128>}, {transform_indices = @transform_1, window_bounds = array<i64: 2, 128>}, {pipeline_mode = #tpu.pipeline_mode<synchronous>, transform_indices = @transform_2, window_bounds = array<i64: 128, 128>}, {pipeline_mode = #tpu.pipeline_mode<synchronous>, transform_indices = @transform_3, window_bounds = array<i64: 128, 128>}, {pipeline_mode = #tpu.pipeline_mode<synchronous>, transform_indices = @transform_4, window_bounds = array<i64: 128, 128>}, {pipeline_mode = #tpu.pipeline_mode<synchronous>, transform_indices = @transform_5, window_bounds = array<i64: 128, 128>}, {pipeline_mode = #tpu.pipeline_mode<synchronous>, transform_indices = @transform_6, window_bounds = array<i64: 8, 128>}, {transform_indices = @transform_7, window_bounds = array<i64: 2, 128>}]} {
    %c0 = arith.constant 0 : index
    %c0_0 = arith.constant 0 : index
    %0 = vector.load %arg1[%c0, %c0_0] : memref<2x128xf32, #tpu.memory_space<vmem>>, vector<2x128xf32>
    %c0_1 = arith.constant 0 : index
    %c0_2 = arith.constant 0 : index
    %1 = vector.load %arg2[%c0_1, %c0_2] : memref<2x128xf32, #tpu.memory_space<vmem>>, vector<2x128xf32>
    %cst = arith.constant 6.250000e-02 : f32
    %2 = vector.broadcast %cst : f32 to vector<2x128xf32>
    %3 = arith.mulf %0, %2 : vector<2x128xf32>
    %4 = arith.mulf %0, %3 : vector<2x128xf32>
    %5 = arith.subf %1, %4 : vector<2x128xf32>
    %cst_3 = arith.constant 0.000000e+00 : f32
    %6 = vector.broadcast %cst_3 : f32 to vector<2x128xf32>
    %7 = arith.maximumf %5, %6 : vector<2x128xf32>
    %cst_4 = arith.constant 0.0666666701 : f32
    %8 = vector.broadcast %cst_4 : f32 to vector<2x128xf32>
    %9 = arith.mulf %7, %8 : vector<2x128xf32>
    %10 = math.sqrt %9 : vector<2x128xf32>
    %c0_5 = arith.constant 0 : index
    %c0_6 = arith.constant 0 : index
    %11 = vector.load %arg7[%c0_5, %c0_6] : memref<8x128xf32, #tpu.memory_space<vmem>>, vector<1x128xf32>
    %c1 = arith.constant 1 : index
    %c0_7 = arith.constant 0 : index
    %12 = vector.load %arg7[%c1, %c0_7] : memref<8x128xf32, #tpu.memory_space<vmem>>, vector<1x128xf32>
    %c2 = arith.constant 2 : index
    %c0_8 = arith.constant 0 : index
    %13 = vector.load %arg7[%c2, %c0_8] : memref<8x128xf32, #tpu.memory_space<vmem>>, vector<1x128xf32>
    %c3 = arith.constant 3 : index
    %c0_9 = arith.constant 0 : index
    %14 = vector.load %arg7[%c3, %c0_9] : memref<8x128xf32, #tpu.memory_space<vmem>>, vector<1x128xf32>
    %c4 = arith.constant 4 : index
    %c0_10 = arith.constant 0 : index
    %15 = vector.load %arg7[%c4, %c0_10] : memref<8x128xf32, #tpu.memory_space<vmem>>, vector<1x128xf32>
    %c5 = arith.constant 5 : index
    %c0_11 = arith.constant 0 : index
    %16 = vector.load %arg7[%c5, %c0_11] : memref<8x128xf32, #tpu.memory_space<vmem>>, vector<1x128xf32>
    %c6 = arith.constant 6 : index
    %c0_12 = arith.constant 0 : index
    %17 = vector.load %arg7[%c6, %c0_12] : memref<8x128xf32, #tpu.memory_space<vmem>>, vector<1x128xf32>
    %c0_13 = arith.constant 0 : index
    %c0_14 = arith.constant 0 : index
    %18 = vector.load %arg3[%c0_13, %c0_14] : memref<128x128xf32, #tpu.memory_space<vmem>>, vector<128x128xf32>
    %cst_15 = arith.constant dense<0.000000e+00> : vector<2x128xf32>
    %19 = tpu.matmul %3, %18, %cst_15 {dimension_numbers = #tpu.dot_dimension_numbers<[1], [0], [0], [1], [0, 0, 1, 1], [], []>} : vector<2x128xf32>, vector<128x128xf32>, vector<2x128xf32> -> vector<2x128xf32>
    %c0_16 = arith.constant 0 : index
    %c0_17 = arith.constant 0 : index
    %20 = vector.load %arg4[%c0_16, %c0_17] : memref<128x128xf32, #tpu.memory_space<vmem>>, vector<128x128xf32>
    %cst_18 = arith.constant dense<0.000000e+00> : vector<2x128xf32>
    %21 = tpu.matmul %10, %20, %cst_18 {dimension_numbers = #tpu.dot_dimension_numbers<[1], [0], [0], [1], [0, 0, 1, 1], [], []>} : vector<2x128xf32>, vector<128x128xf32>, vector<2x128xf32> -> vector<2x128xf32>
    %22 = arith.addf %19, %21 : vector<2x128xf32>
    %23 = vector.broadcast %11 : vector<1x128xf32> to vector<2x128xf32>
    %24 = arith.addf %22, %23 : vector<2x128xf32>
    %cst_19 = arith.constant 0.000000e+00 : f32
    %25 = vector.broadcast %cst_19 : f32 to vector<2x128xf32>
    %26 = arith.maximumf %24, %25 : vector<2x128xf32>
    %27 = vector.broadcast %12 : vector<1x128xf32> to vector<2x128xf32>
    %28 = arith.mulf %26, %27 : vector<2x128xf32>
    %29 = vector.broadcast %13 : vector<1x128xf32> to vector<2x128xf32>
    %30 = arith.addf %28, %29 : vector<2x128xf32>
    %c0_20 = arith.constant 0 : index
    %c0_21 = arith.constant 0 : index
    %31 = vector.load %arg5[%c0_20, %c0_21] : memref<128x128xf32, #tpu.memory_space<vmem>>, vector<128x128xf32>
    %cst_22 = arith.constant dense<0.000000e+00> : vector<2x128xf32>
    %32 = tpu.matmul %30, %31, %cst_22 {dimension_numbers = #tpu.dot_dimension_numbers<[1], [0], [0], [1], [0, 0, 1, 1], [], []>} : vector<2x128xf32>, vector<128x128xf32>, vector<2x128xf32> -> vector<2x128xf32>
    %33 = vector.broadcast %14 : vector<1x128xf32> to vector<2x128xf32>
    %34 = arith.addf %32, %33 : vector<2x128xf32>
    %cst_23 = arith.constant 0.000000e+00 : f32
    %35 = vector.broadcast %cst_23 : f32 to vector<2x128xf32>
    %36 = arith.maximumf %34, %35 : vector<2x128xf32>
    %37 = vector.broadcast %15 : vector<1x128xf32> to vector<2x128xf32>
    %38 = arith.mulf %36, %37 : vector<2x128xf32>
    %39 = vector.broadcast %16 : vector<1x128xf32> to vector<2x128xf32>
    %40 = arith.addf %38, %39 : vector<2x128xf32>
    %c0_24 = arith.constant 0 : index
    %c0_25 = arith.constant 0 : index
    %41 = vector.load %arg6[%c0_24, %c0_25] : memref<128x128xf32, #tpu.memory_space<vmem>>, vector<128x128xf32>
    %cst_26 = arith.constant dense<0.000000e+00> : vector<2x128xf32>
    %42 = tpu.matmul %40, %41, %cst_26 {dimension_numbers = #tpu.dot_dimension_numbers<[1], [0], [0], [1], [0, 0, 1, 1], [], []>} : vector<2x128xf32>, vector<128x128xf32>, vector<2x128xf32> -> vector<2x128xf32>
    %43 = vector.broadcast %17 : vector<1x128xf32> to vector<2x128xf32>
    %44 = arith.addf %42, %43 : vector<2x128xf32>
    %45 = tpu.iota {dimensions = array<i32: 1>} : vector<2x128xi32>
    %c2_i32 = arith.constant 2 : i32
    %46 = vector.broadcast %c2_i32 : i32 to vector<2x128xi32>
    %47 = arith.cmpi slt, %45, %46 : vector<2x128xi32>
    %cst_27 = arith.constant -1.000000e+30 : f32
    %48 = vector.broadcast %cst_27 : f32 to vector<2x128xf32>
    %49 = arith.select %47, %44, %48 : vector<2x128xi1>, vector<2x128xf32>
    %cst_28 = arith.constant dense<0xFF800000> : vector<2xf32>
    %50 = vector.multi_reduction <maximumf>, %49, %cst_28 [1] : vector<2x128xf32> to vector<2xf32>
    %51 = vector.shape_cast %50 : vector<2xf32> to vector<2x1xf32>
    %52 = vector.broadcast %51 : vector<2x1xf32> to vector<2x128xf32>
    %53 = arith.subf %49, %52 : vector<2x128xf32>
    %54 = math.exp %53 : vector<2x128xf32>
    %cst_29 = arith.constant 0.000000e+00 : f32
    %55 = vector.broadcast %cst_29 : f32 to vector<2x128xf32>
    %56 = arith.select %47, %54, %55 : vector<2x128xi1>, vector<2x128xf32>
    %cst_30 = arith.constant dense<0.000000e+00> : vector<2xf32>
    %57 = vector.multi_reduction <add>, %56, %cst_30 [1] : vector<2x128xf32> to vector<2xf32>
    %58 = vector.shape_cast %57 : vector<2xf32> to vector<2x1xf32>
    %59 = math.log %58 : vector<2x1xf32>
    %60 = arith.addf %59, %51 : vector<2x1xf32>
    %61 = vector.broadcast %60 : vector<2x1xf32> to vector<2x128xf32>
    %62 = arith.subf %44, %61 : vector<2x128xf32>
    %cst_31 = arith.constant 0.000000e+00 : f32
    %63 = vector.broadcast %cst_31 : f32 to vector<2x128xf32>
    %64 = arith.select %47, %62, %63 : vector<2x128xi1>, vector<2x128xf32>
    %c0_32 = arith.constant 0 : index
    %c0_33 = arith.constant 0 : index
    %65 = vector.load %arg8[%c0_32, %c0_33] : memref<2x128xf32, #tpu.memory_space<vmem>>, vector<2x128xf32>
    tpu.vector_store %arg8[%c0_32, %c0_33], %64 {strides = array<i32>} : memref<2x128xf32, #tpu.memory_space<vmem>>, vector<2x128xf32>,
    return
  }
  func.func @transform_0(%arg0: i32) -> (i32, i32) {
    %c0_i32 = arith.constant 0 : i32
    %c0_i32_0 = arith.constant 0 : i32
    return %arg0, %c0_i32 : i32, i32
  }
  func.func @transform_1(%arg0: i32) -> (i32, i32) {
    %c0_i32 = arith.constant 0 : i32
    %c0_i32_0 = arith.constant 0 : i32
    return %arg0, %c0_i32 : i32, i32
  }
  func.func @transform_2(%arg0: i32) -> (i32, i32) {
    %c0_i32 = arith.constant 0 : i32
    %c0_i32_0 = arith.constant 0 : i32
    %c0_i32_1 = arith.constant 0 : i32
    return %c0_i32, %c0_i32_0 : i32, i32
  }
  func.func @transform_3(%arg0: i32) -> (i32, i32) {
    %c0_i32 = arith.constant 0 : i32
    %c0_i32_0 = arith.constant 0 : i32
    %c0_i32_1 = arith.constant 0 : i32
    return %c0_i32, %c0_i32_0 : i32, i32
  }
  func.func @transform_4(%arg0: i32) -> (i32, i32) {
    %c0_i32 = arith.constant 0 : i32
    %c0_i32_0 = arith.constant 0 : i32
    %c0_i32_1 = arith.constant 0 : i32
    return %c0_i32, %c0_i32_0 : i32, i32
  }
  func.func @transform_5(%arg0: i32) -> (i32, i32) {
    %c0_i32 = arith.constant 0 : i32
    %c0_i32_0 = arith.constant 0 : i32
    %c0_i32_1 = arith.constant 0 : i32
    return %c0_i32, %c0_i32_0 : i32, i32
  }
  func.func @transform_6(%arg0: i32) -> (i32, i32) {
    %c0_i32 = arith.constant 0 : i32
    %c0_i32_0 = arith.constant 0 : i32
    %c0_i32_1 = arith.constant 0 : i32
    return %c0_i32, %c0_i32_0 : i32, i32
  }
  func.func @transform_7(%arg0: i32) -> (i32, i32) {
    %c0_i32 = arith.constant 0 : i32
    %c0_i32_0 = arith.constant 0 : i32
    return %arg0, %c0_i32 : i32, i32
  }
}

</mosaic_0001>

<llo_original>
// kernel: pallas_model_forward.2
$region0: #{pallas_model_forward.2}
  #allocation0 [shape = 'u32[]', space=smem, size = 0x4, offset = 0x4, fixed_abs, tag = 'smem constant byte address 0x4 - core index']
  #allocation1 [shape = 'u32[72,128]{1,0:T(1,128)}', space=vmem, size = 0x9000, scoped, tag = 'internal scratch']
  %s0 = inlined_call_operand.vmem [shape: bf16[64,128], index: 0, kind: input, shape index: {}]
  %s1 = inlined_call_operand.vmem [shape: bf16[1408,128], index: 1, kind: input, shape index: {}]
  %s2 = inlined_call_operand.vmem [shape: f32[8,128], index: 2, kind: input, shape index: {}]
  %s3 = inlined_call_operand.vmem [shape: f32[2,2,128,128], index: 3, kind: output, shape index: {}]
  %s4 = sld [smem:[#allocation0]]
  $region45: #{pallas_model_forward.2} parent=0
    _
  %s6 = ssub.s32 1, %s4
  %s7 = scalar_select 0, %s6, %s4
  loop: start=0, step=1, limit=4
  $region2: #{pallas_model_forward.2} parent=0 // loop_pre_header
    _
  $region3: #{pallas_model_forward.2} parent=0 // loop_header
    %s9 = sphi 0, %s13
    %p10 = scmp.ge.s32.totalorder %s9, 4
    %s19 = sphi 0, %s21
    %s22 = sphi 0, %s19
    %s23 = sphi 0, %s22
    %s39 = sphi 0, %s23
    %s43 = sphi 0, %s43
    %s45 = sphi 0, %s43
    %s46 = sphi 0, %s45
    %s60 = sphi 0, %s46
    %s64 = sphi 0, %s64
    %s66 = sphi 0, %s64
    %s67 = sphi 0, %s66
    %s81 = sphi 0, %s67
    %s87 = sphi 0, %s89
    %s90 = sphi 0, %s87
    %s91 = sphi 0, %s90
    %s107 = sphi 0, %s91
  $region4: #{pallas_model_forward.2} parent=0 // loop_header_branch
    %12 = sbr.rel (%p10) target = $region8
  $region5: #{pallas_model_forward.2} parent=0 // loop_body
    %s14 = ssub.s32 %s9, 1
    %s15 = ssub.s32 %s9, 2
    %s16 = sadd.s32 %s9, 1
    %s17 = ssub.s32 %s9, %s16
    %p18 = scmp.eq.s32.totalorder %s17, 0
    %s20 = sadd.s32 %s19, 1
    %s21 = scalar_select %p18, %s19, %s20
    %p24 = pneg %p18
    %p25 = scmp.eq.s32.totalorder %s9, 1
    %p26 = por %p24, %p25
    %p27 = scmp.ne.s32.totalorder %s19, %s22
    %p28 = scmp.eq.s32.totalorder %s9, 0
    %p29 = por %p27, %p28
    %p30 = scmp.ne.s32.totalorder %s19, %s22
    %p31 = scmp.eq.s32.totalorder %s14, 1
    %p32 = por %p30, %p31
    %p33 = scmp.ne.s32.totalorder %s22, %s23
    %p34 = scmp.eq.s32.totalorder %s14, 0
    %p35 = por %p33, %p34
    %p36 = scmp.ne.s32.totalorder %s22, %s23
    %p37 = scmp.eq.s32.totalorder %s15, 1
    %p38 = por %p36, %p37
    %p40 = scmp.ne.s32.totalorder %s23, %s39
    %p41 = scmp.eq.s32.totalorder %s15, 0
    %p42 = por %p40, %p41
    %s44 = sadd.s32 %s43, 1
    %p47 = scmp.eq.s32.totalorder %s9, 1
    %p48 = scmp.ne.s32.totalorder %s43, %s45
    %p49 = scmp.eq.s32.totalorder %s9, 0
    %p50 = por %p48, %p49
    %p51 = scmp.ne.s32.totalorder %s43, %s45
    %p52 = scmp.eq.s32.totalorder %s14, 1
    %p53 = por %p51, %p52
    %p54 = scmp.ne.s32.totalorder %s45, %s46
    %p55 = scmp.eq.s32.totalorder %s14, 0
    %p56 = por %p54, %p55
    %p57 = scmp.ne.s32.totalorder %s45, %s46
    %p58 = scmp.eq.s32.totalorder %s15, 1
    %p59 = por %p57, %p58
    %p61 = scmp.ne.s32.totalorder %s46, %s60
    %p62 = scmp.eq.s32.totalorder %s15, 0
    %p63 = por %p61, %p62
    %s65 = sadd.s32 %s64, 1
    %p68 = scmp.eq.s32.totalorder %s9, 1
    %p69 = scmp.ne.s32.totalorder %s64, %s66
    %p70 = scmp.eq.s32.totalorder %s9, 0
    %p71 = por %p69, %p70
    %p72 = scmp.ne.s32.totalorder %s64, %s66
    %p73 = scmp.eq.s32.totalorder %s14, 1
    %p74 = por %p72, %p73
    %p75 = scmp.ne.s32.totalorder %s66, %s67
    %p76 = scmp.eq.s32.totalorder %s14, 0
    %p77 = por %p75, %p76
    %p78 = scmp.ne.s32.totalorder %s66, %s67
    %p79 = scmp.eq.s32.totalorder %s15, 1
    %p80 = por %p78, %p79
    %p82 = scmp.ne.s32.totalorder %s67, %s81
    %p83 = scmp.eq.s32.totalorder %s15, 0
    %p84 = por %p82, %p83
    %s85 = ssub.s32 %s9, %s16
    %p86 = scmp.eq.s32.totalorder %s85, 0
    %s88 = sadd.s32 %s87, 1
    %s89 = scalar_select %p86, %s87, %s88
    %p92 = pneg %p86
    %p93 = scmp.eq.s32.totalorder %s9, 1
    %p94 = por %p92, %p93
    %p95 = scmp.ne.s32.totalorder %s87, %s90
    %p96 = scmp.eq.s32.totalorder %s9, 0
    %p97 = por %p95, %p96
    %p98 = scmp.ne.s32.totalorder %s87, %s90
    %p99 = scmp.eq.s32.totalorder %s14, 1
    %p100 = por %p98, %p99
    %p101 = scmp.ne.s32.totalorder %s90, %s91
    %p102 = scmp.eq.s32.totalorder %s14, 0
    %p103 = por %p101, %p102
    %p104 = scmp.ne.s32.totalorder %s90, %s91
    %p105 = scmp.eq.s32.totalorder %s15, 1
    %p106 = por %p104, %p105
    %p108 = scmp.ne.s32.totalorder %s91, %s107
    %p109 = scmp.eq.s32.totalorder %s15, 0
    %p110 = por %p108, %p109
    %p111 = scmp.le.s32.totalorder 1, %s9
    %p112 = scmp.lt.s32.totalorder %s9, 3
    %p113 = pnand %p111, %p112
    %p114 = pneg %p113
    // Predicated region
    $region9: #{pallas_model_forward.2} parent=5 // pred_check
      _
    $region10: #{pallas_model_forward.2} parent=5 // pred_check_branch
      %116 = sbr.rel (%p113) target = $region12
    $region11: #{pallas_model_forward.2} parent=5 // pred_region
      %s117 = ssub.s32 %s9, 1
      // Predicated region
      $region13: #{pallas_model_forward.2} parent=11 // pred_check
        %p118 = pneg %p56
      $region14: #{pallas_model_forward.2} parent=11 // pred_check_branch
        %120 = sbr.rel (%p118) target = $region16
      $region15: #{pallas_model_forward.2} parent=11 // pred_region
        _
      $region16: #{pallas_model_forward.2} parent=11 // pred_fallthru
        _
      // Predicated region
      $region17: #{pallas_model_forward.2} parent=11 // pred_check
        %p121 = pneg %p77
      $region18: #{pallas_model_forward.2} parent=11 // pred_check_branch
        %123 = sbr.rel (%p121) target = $region20
      $region19: #{pallas_model_forward.2} parent=11 // pred_region
        _
      $region20: #{pallas_model_forward.2} parent=11 // pred_fallthru
        _
    $region12: #{pallas_model_forward.2} parent=5 // pred_fallthru
      _
    %p124 = scmp.lt.s32.totalorder %s9, 2
    // Predicated region
    $region21: #{pallas_model_forward.2} parent=5 // pred_check
      %p125 = pneg %p124
    $region22: #{pallas_model_forward.2} parent=5 // pred_check_branch
      %127 = sbr.rel (%p125) target = $region24
    $region23: #{pallas_model_forward.2} parent=5 // pred_region
      // Predicated region
      $region25: #{pallas_model_forward.2} parent=23 // pred_check
        %p128 = pneg %p29
      $region26: #{pallas_model_forward.2} parent=23 // pred_check_branch
        %130 = sbr.rel (%p128) target = $region28
      $region27: #{pallas_model_forward.2} parent=23 // pred_region
        %s131 = smul.u32 4, %s9
        %p132 = scmp.lt.s32.totalorder %s131, 7
        %s133 = scalar_select %p132, %s131, 7
        %s134 = smul.addr %s133, 4
        %s135 = scalar_lea.vmem %s0, %s134
        %s136 = smul.u32 4, %s9
      $region28: #{pallas_model_forward.2} parent=23 // pred_fallthru
        _
    $region24: #{pallas_model_forward.2} parent=5 // pred_fallthru
      _
    %p137 = scmp.le.s32.totalorder 1, %s9
    %p138 = scmp.lt.s32.totalorder %s9, 3
    %p139 = pnand %p137, %p138
    %p140 = pneg %p139
    // Predicated region
    $region29: #{pallas_model_forward.2} parent=5 // pred_check
      _
    $region30: #{pallas_model_forward.2} parent=5 // pred_check_branch
      %142 = sbr.rel (%p139) target = $region32
    $region31: #{pallas_model_forward.2} parent=5 // pred_region
      %s143 = ssub.s32 %s9, 1
      %s144 = smul.u32 4, %s14
      %p145 = scmp.lt.s32.totalorder %s144, 7
      %s146 = scalar_select %p145, %s144, 7
      %s147 = smul.addr %s146, 4
      %s148 = scalar_lea.vmem %s0, %s147
      %p149 = pneg %p35
      %p150 = pneg %p32
      %p151 = pneg %p56
      %p152 = pneg %p53
      %p153 = pneg %p77
      %p154 = pneg %p74
      %p155 = pneg %p103
      %p156 = pneg %p100
      %p157 = scmp.lt.s32.totalorder %s14, 1
      %s158 = scalar_select %p157, %s14, 1
      %s159 = smul.addr %s158, 32
      %s160 = smul.addr %s159, 8
      %s161 = scalar_lea.vmem %s3, %s160
      %s162 = smul.u32 4, %s14
      %p163 = scmp.lt.s32.totalorder %s162, 7
      %s164 = scalar_select %p163, %s162, 7
      %s165 = smul.addr %s164, 4
      %s166 = scalar_lea.vmem %s0, %s165
      %s167 = smul.u32 4, %s14
      %p168 = scmp.lt.s32.totalorder %s14, 1
      %s169 = scalar_select %p168, %s14, 1
      %s170 = smul.addr %s169, 32
      %s171 = smul.addr %s170, 8
      %s172 = scalar_lea.vmem %s3, %s171
      %v173 = vld [vmem:[%s2] sm:$0x1]
      %v174 = vld [vmem:[%s2 + $0x1] sm:$0x1]
      %v175 = vld [vmem:[%s2 + $0x2] sm:$0x1]
      %v176 = vld [vmem:[%s2 + $0x3] sm:$0x1]
      %v177 = vld [vmem:[%s2 + $0x4] sm:$0x1]
      %v178 = vld [vmem:[%s166] sm:$0xf]
      %v179 = vld [vmem:[%s166 + $0x4] sm:$0xf]
      %v180 = vld [vmem:[%s166 + $0x8] sm:$0xf]
      %v181 = vld [vmem:[%s166 + $0xc] sm:$0x3]
      %v182 = vld [vmem:[%s166 + $0xc] sm:$0x7]
      %v187 = vunpack.c.l.b16 %v178
      %v188 = vunpack.c.l.b16 %v179
      %v189 = vunpack.c.l.b16 %v180
      %v190 = vunpack.c.l.b16 %v181
      %v191 = vpack.c.b16 %v188, %v187
      %v192 = vpack.c.b16 %v190, %v189
      %v196 = vunpack.c.l.b16 %v182
      %v197 = vpack.c.b16 %v196, %v189
      %vm198 = vsmask.f32 7424
      %v200 = vshrl.u32 %v191, 16
      %v202 = vshll.u32 %v191, 16
      %v204 = vrot.slane %v202, 1
      %v205 = vor.u32 %v200, %v204
      %v207 = vshll.u32 %v197, 16
      %v209 = vrot.slane %v207, 1
      %v210 = vsel %vm198, %v205, %v209
      %v211 = vshrl.u32 %v197, 16
      %v213 = vor.u32 %v211, %v209
      %v216 = vld [vmem:[%s166] sm:$0xe]
      %v217 = vld [vmem:[%s166 + $0xc] sm:$0xf]
      %v219 = vunpack.c.l.b16 %v216
      %v220 = vpack.c.b16 %v188, %v219
      %v222 = vunpack.c.l.b16 %v217
      %v223 = vpack.c.b16 %v222, %v189
      %v225 = vshrl.u32 %v220, 16
      %v227 = vshll.u32 %v220, 16
      %v229 = vrot.slane %v227, 1
      %v230 = vor.u32 %v225, %v229
      %v232 = vshll.u32 %v223, 16
      %v234 = vrot.slane %v232, 1
      %v235 = vsel %vm198, %v230, %v234
      %v236 = vshrl.u32 %v223, 16
      %v238 = vor.u32 %v236, %v234
      %v239 = vld [vmem:[%s1] sm:$0xf]
      %v240 = vld [vmem:[%s1 + $0x4] sm:$0xf]
      %v241 = vld [vmem:[%s1 + $0x8] sm:$0xf]
      %v242 = vld [vmem:[%s1 + $0xc] sm:$0xf]
      %v243 = vld [vmem:[%s1 + $0x10] sm:$0xf]
      %v244 = vld [vmem:[%s1 + $0x14] sm:$0xf]
      %v245 = vld [vmem:[%s1 + $0x18] sm:$0xf]
      %v246 = vld [vmem:[%s1 + $0x1c] sm:$0xf]
      %v247 = vld [vmem:[%s1 + $0x20] sm:$0xf]
      %v248 = vld [vmem:[%s1 + $0x24] sm:$0xf]
      %v249 = vld [vmem:[%s1 + $0x28] sm:$0xf]
      %v250 = vld [vmem:[%s1 + $0x2c] sm:$0xf]
      %v251 = vld [vmem:[%s1 + $0x30] sm:$0xf]
      %v252 = vld [vmem:[%s1 + $0x34] sm:$0xf]
      %v253 = vld [vmem:[%s1 + $0x38] sm:$0xf]
      %v254 = vld [vmem:[%s1 + $0x3c] sm:$0xf]
      %v255 = vld [vmem:[%s1 + $0x40] sm:$0xf]
      %v256 = vld [vmem:[%s1 + $0x44] sm:$0xf]
      %v257 = vld [vmem:[%s1 + $0x48] sm:$0xf]
      %v258 = vld [vmem:[%s1 + $0x4c] sm:$0xf]
      %v259 = vld [vmem:[%s1 + $0x50] sm:$0xf]
      %v260 = vld [vmem:[%s1 + $0x54] sm:$0xf]
      %v261 = vld [vmem:[%s1 + $0x58] sm:$0xf]
      %v262 = vld [vmem:[%s1 + $0x5c] sm:$0xf]
      %v263 = vld [vmem:[%s1 + $0x60] sm:$0xf]
      %v264 = vld [vmem:[%s1 + $0x64] sm:$0xf]
      %v265 = vld [vmem:[%s1 + $0x68] sm:$0xf]
      %v266 = vld [vmem:[%s1 + $0x6c] sm:$0xf]
      %v267 = vld [vmem:[%s1 + $0x70] sm:$0xf]
      %v268 = vld [vmem:[%s1 + $0x74] sm:$0xf]
      %v269 = vld [vmem:[%s1 + $0x78] sm:$0xf]
      %v270 = vld [vmem:[%s1 + $0x7c] sm:$0xf]
      %v271 = vld [vmem:[%s1 + $0x80] sm:$0xf]
      %v272 = vld [vmem:[%s1 + $0x84] sm:$0xf]
      %v273 = vld [vmem:[%s1 + $0x88] sm:$0xf]
      %v274 = vld [vmem:[%s1 + $0x8c] sm:$0xf]
      %v275 = vld [vmem:[%s1 + $0x90] sm:$0xf]
      %v276 = vld [vmem:[%s1 + $0x94] sm:$0xf]
      %v277 = vld [vmem:[%s1 + $0x98] sm:$0xf]
      %v278 = vld [vmem:[%s1 + $0x9c] sm:$0xf]
      %v279 = vld [vmem:[%s1 + $0xa0] sm:$0xf]
      %v280 = vld [vmem:[%s1 + $0xa4] sm:$0xf]
      %v281 = vld [vmem:[%s1 + $0xa8] sm:$0xf]
      %v282 = vld [vmem:[%s1 + $0xac] sm:$0xf]
      %v283 = vld [vmem:[%s1 + $0xb0] sm:$0xf]
      %v284 = vld [vmem:[%s1 + $0xb4] sm:$0xf]
      %v285 = vld [vmem:[%s1 + $0xb8] sm:$0xf]
      %v286 = vld [vmem:[%s1 + $0xbc] sm:$0xf]
      %v287 = vld [vmem:[%s1 + $0xc0] sm:$0xf]
      %v288 = vld [vmem:[%s1 + $0xc4] sm:$0xf]
      %v289 = vld [vmem:[%s1 + $0xc8] sm:$0xf]
      %v290 = vld [vmem:[%s1 + $0xcc] sm:$0xf]
      %v291 = vld [vmem:[%s1 + $0xd0] sm:$0xf]
      %v292 = vld [vmem:[%s1 + $0xd4] sm:$0xf]
      %v293 = vld [vmem:[%s1 + $0xd8] sm:$0xf]
      %v294 = vld [vmem:[%s1 + $0xdc] sm:$0xf]
      %v295 = vld [vmem:[%s1 + $0xe0] sm:$0xf]
      %v296 = vld [vmem:[%s1 + $0xe4] sm:$0xf]
      %v297 = vld [vmem:[%s1 + $0xe8] sm:$0xf]
      %v298 = vld [vmem:[%s1 + $0xec] sm:$0xf]
      %v299 = vld [vmem:[%s1 + $0xf0] sm:$0xf]
      %v300 = vld [vmem:[%s1 + $0xf4] sm:$0xf]
      %v301 = vld [vmem:[%s1 + $0xf8] sm:$0xf]
      %v302 = vld [vmem:[%s1 + $0xfc] sm:$0xf]
      %vm303 = vcmask 1046528
      %v304 = vrot.slane %v220, 1
      %v305 = vrot.slane %v197, 1
      %v306 = vsel %vm303, %v304, %v305
      %v307 = vrot.slane %v235, 1
      %v308 = vrot.slane %v238, 1
      %v309 = vsel %vm303, %v307, %v308
      %v346 = vunpack.c.l.b16 %v271
      %v347 = vunpack.c.l.b16 %v272
      %v348 = vunpack.c.l.b16 %v273
      %v349 = vunpack.c.l.b16 %v274
      %v350 = vunpack.c.l.b16 %v275
      %v351 = vunpack.c.l.b16 %v276
      %v352 = vunpack.c.l.b16 %v277
      %v353 = vunpack.c.l.b16 %v278
      %v354 = vunpack.c.l.b16 %v279
      %v355 = vunpack.c.l.b16 %v280
      %v356 = vunpack.c.l.b16 %v281
      %v357 = vunpack.c.l.b16 %v282
      %v358 = vunpack.c.l.b16 %v283
      %v359 = vunpack.c.l.b16 %v284
      %v360 = vunpack.c.l.b16 %v285
      %v361 = vunpack.c.l.b16 %v286
      %v362 = vunpack.c.l.b16 %v287
      %v363 = vunpack.c.l.b16 %v288
      %v364 = vunpack.c.l.b16 %v289
      %v365 = vunpack.c.l.b16 %v290
      %v366 = vunpack.c.l.b16 %v291
      %v367 = vunpack.c.l.b16 %v292
      %v368 = vunpack.c.l.b16 %v293
      %v369 = vunpack.c.l.b16 %v294
      %v370 = vunpack.c.l.b16 %v295
      %v371 = vunpack.c.l.b16 %v296
      %v372 = vunpack.c.l.b16 %v297
      %v373 = vunpack.c.l.b16 %v298
      %v374 = vunpack.c.l.b16 %v299
      %v375 = vunpack.c.l.b16 %v300
      %v376 = vunpack.c.l.b16 %v301
      %v377 = vunpack.c.l.b16 %v302
      %v378 = vpack.c.b16 %v347, %v346
      %v379 = vpack.c.b16 %v349, %v348
      %v380 = vpack.c.b16 %v351, %v350
      %v381 = vpack.c.b16 %v353, %v352
      %v382 = vpack.c.b16 %v355, %v354
      %v383 = vpack.c.b16 %v357, %v356
      %v384 = vpack.c.b16 %v359, %v358
      %v385 = vpack.c.b16 %v361, %v360
      %v386 = vpack.c.b16 %v363, %v362
      %v387 = vpack.c.b16 %v365, %v364
      %v388 = vpack.c.b16 %v367, %v366
      %v389 = vpack.c.b16 %v369, %v368
      %v390 = vpack.c.b16 %v371, %v370
      %v391 = vpack.c.b16 %v373, %v372
      %v392 = vpack.c.b16 %v375, %v374
      %v393 = vpack.c.b16 %v377, %v376
      %410 = vmatpush.bf16.msra.mxu0 %v385
      %411 = vmatpush.bf16.msra.mxu0 %v384
      %412 = vmatpush.bf16.msra.mxu0 %v383
      %413 = vmatpush.bf16.msra.mxu0 %v382
      %414 = vmatpush.bf16.msra.mxu0 %v381
      %415 = vmatpush.bf16.msra.mxu0 %v380
      %416 = vmatpush.bf16.msra.mxu0 %v379
      %417 = vmatpush.bf16.msra.mxu0 %v378
      %418 = vmatmul.bf16.gmra.mxu0 %v306
      %v419 = vpop.f32.mrf.mxu0
      %v420 = vadd.f32 0.0, %v419
      %v421 = vpop.f32.mrf.mxu0
      %v422 = vadd.f32 0.0, %v421
      %423 = vmatmul.bf16.gmra.mxu0 %v305
      %v424 = vpop.f32.mrf.mxu0
      %v425 = vadd.f32 0.0, %v424
      %v426 = vpop.f32.mrf.mxu0
      %v427 = vadd.f32 0.0, %v426
      %428 = vdwg.mxu0
      %429 = vmatpush.bf16.msra.mxu0 %v393
      %430 = vmatpush.bf16.msra.mxu0 %v392
      %431 = vmatpush.bf16.msra.mxu0 %v391
      %432 = vmatpush.bf16.msra.mxu0 %v390
      %433 = vmatpush.bf16.msra.mxu0 %v389
      %434 = vmatpush.bf16.msra.mxu0 %v388
      %435 = vmatpush.bf16.msra.mxu0 %v387
      %436 = vmatpush.bf16.msra.mxu0 %v386
      %437 = vmatmul.bf16.gmra.mxu0 %v309
      %v438 = vpop.f32.mrf.mxu0
      %v439 = vadd.f32 %v420, %v438
      %v440 = vpop.f32.mrf.mxu0
      %v441 = vadd.f32 %v422, %v440
      %442 = vmatmul.bf16.gmra.mxu0 %v308
      %v443 = vpop.f32.mrf.mxu0
      %v444 = vadd.f32 %v425, %v443
      %v445 = vpop.f32.mrf.mxu0
      %v446 = vadd.f32 %v427, %v445
      %447 = vdwg.mxu0
      %v480 = vunpack.c.l.b16 %v239
      %v481 = vunpack.c.l.b16 %v240
      %v482 = vunpack.c.l.b16 %v241
      %v483 = vunpack.c.l.b16 %v242
      %v484 = vunpack.c.l.b16 %v243
      %v485 = vunpack.c.l.b16 %v244
      %v486 = vunpack.c.l.b16 %v245
      %v487 = vunpack.c.l.b16 %v246
      %v488 = vunpack.c.l.b16 %v247
      %v489 = vunpack.c.l.b16 %v248
      %v490 = vunpack.c.l.b16 %v249
      %v491 = vunpack.c.l.b16 %v250
      %v492 = vunpack.c.l.b16 %v251
      %v493 = vunpack.c.l.b16 %v252
      %v494 = vunpack.c.l.b16 %v253
      %v495 = vunpack.c.l.b16 %v254
      %v496 = vunpack.c.l.b16 %v255
      %v497 = vunpack.c.l.b16 %v256
      %v498 = vunpack.c.l.b16 %v257
      %v499 = vunpack.c.l.b16 %v258
      %v500 = vunpack.c.l.b16 %v259
      %v501 = vunpack.c.l.b16 %v260
      %v502 = vunpack.c.l.b16 %v261
      %v503 = vunpack.c.l.b16 %v262
      %v504 = vunpack.c.l.b16 %v263
      %v505 = vunpack.c.l.b16 %v264
      %v506 = vunpack.c.l.b16 %v265
      %v507 = vunpack.c.l.b16 %v266
      %v508 = vunpack.c.l.b16 %v267
      %v509 = vunpack.c.l.b16 %v268
      %v510 = vunpack.c.l.b16 %v269
      %v511 = vunpack.c.l.b16 %v270
      %v512 = vpack.c.b16 %v481, %v480
      %v513 = vpack.c.b16 %v483, %v482
      %v514 = vpack.c.b16 %v485, %v484
      %v515 = vpack.c.b16 %v487, %v486
      %v516 = vpack.c.b16 %v489, %v488
      %v517 = vpack.c.b16 %v491, %v490
      %v518 = vpack.c.b16 %v493, %v492
      %v519 = vpack.c.b16 %v495, %v494
      %v520 = vpack.c.b16 %v497, %v496
      %v521 = vpack.c.b16 %v499, %v498
      %v522 = vpack.c.b16 %v501, %v500
      %v523 = vpack.c.b16 %v503, %v502
      %v524 = vpack.c.b16 %v505, %v504
      %v525 = vpack.c.b16 %v507, %v506
      %v526 = vpack.c.b16 %v509, %v508
      %v527 = vpack.c.b16 %v511, %v510
      %544 = vmatpush.bf16.msra.mxu0 %v519
      %545 = vmatpush.bf16.msra.mxu0 %v518
      %546 = vmatpush.bf16.msra.mxu0 %v517
      %547 = vmatpush.bf16.msra.mxu0 %v516
      %548 = vmatpush.bf16.msra.mxu0 %v515
      %549 = vmatpush.bf16.msra.mxu0 %v514
      %550 = vmatpush.bf16.msra.mxu0 %v513
      %551 = vmatpush.bf16.msra.mxu0 %v512
      %552 = vmatmul.bf16.gmra.mxu0 %v191
      %v553 = vpop.f32.mrf.mxu0
      %v554 = vadd.f32 %v439, %v553
      %v555 = vpop.f32.mrf.mxu0
      %v556 = vadd.f32 %v441, %v555
      %557 = vmatmul.bf16.gmra.mxu0 %v192
      %v558 = vpop.f32.mrf.mxu0
      %v559 = vadd.f32 %v444, %v558
      %v560 = vpop.f32.mrf.mxu0
      %v561 = vadd.f32 %v446, %v560
      %562 = vdwg.mxu0
      %563 = vmatpush.bf16.msra.mxu0 %v527
      %564 = vmatpush.bf16.msra.mxu0 %v526
      %565 = vmatpush.bf16.msra.mxu0 %v525
      %566 = vmatpush.bf16.msra.mxu0 %v524
      %567 = vmatpush.bf16.msra.mxu0 %v523
      %568 = vmatpush.bf16.msra.mxu0 %v522
      %569 = vmatpush.bf16.msra.mxu0 %v521
      %570 = vmatpush.bf16.msra.mxu0 %v520
      %571 = vmatmul.bf16.gmra.mxu0 %v210
      %v572 = vpop.f32.mrf.mxu0
      %v573 = vadd.f32 %v554, %v572
      %v574 = vpop.f32.mrf.mxu0
      %v575 = vadd.f32 %v556, %v574
      %576 = vmatmul.bf16.gmra.mxu0 %v213
      %v577 = vpop.f32.mrf.mxu0
      %v578 = vadd.f32 %v559, %v577
      %v579 = vpop.f32.mrf.mxu0
      %v580 = vadd.f32 %v561, %v579
      %581 = vdwg.mxu0
      %v582 = vld [vmem:[%s166] sm:$0xc]
      %v583 = vld [vmem:[%s1 + $0x100] sm:$0xf]
      %v584 = vld [vmem:[%s1 + $0x104] sm:$0xf]
      %v585 = vld [vmem:[%s1 + $0x108] sm:$0xf]
      %v586 = vld [vmem:[%s1 + $0x10c] sm:$0xf]
      %v587 = vld [vmem:[%s1 + $0x110] sm:$0xf]
      %v588 = vld [vmem:[%s1 + $0x114] sm:$0xf]
      %v589 = vld [vmem:[%s1 + $0x118] sm:$0xf]
      %v590 = vld [vmem:[%s1 + $0x11c] sm:$0xf]
      %v591 = vld [vmem:[%s1 + $0x120] sm:$0xf]
      %v592 = vld [vmem:[%s1 + $0x124] sm:$0xf]
      %v593 = vld [vmem:[%s1 + $0x128] sm:$0xf]
      %v594 = vld [vmem:[%s1 + $0x12c] sm:$0xf]
      %v595 = vld [vmem:[%s1 + $0x130] sm:$0xf]
      %v596 = vld [vmem:[%s1 + $0x134] sm:$0xf]
      %v597 = vld [vmem:[%s1 + $0x138] sm:$0xf]
      %v598 = vld [vmem:[%s1 + $0x13c] sm:$0xf]
      %v600 = vunpack.c.l.b16 %v582
      %v601 = vpack.c.b16 %v188, %v600
      %vm602 = vcmask 1045504
      %v603 = vrot.slane %v601, 2
      %v604 = vrot.slane %v223, 2
      %v605 = vsel %vm602, %v603, %v604
      %v624 = vunpack.c.l.b16 %v583
      %v625 = vunpack.c.l.b16 %v584
      %v626 = vunpack.c.l.b16 %v585
      %v627 = vunpack.c.l.b16 %v586
      %v628 = vunpack.c.l.b16 %v587
      %v629 = vunpack.c.l.b16 %v588
      %v630 = vunpack.c.l.b16 %v589
      %v631 = vunpack.c.l.b16 %v590
      %v632 = vunpack.c.l.b16 %v591
      %v633 = vunpack.c.l.b16 %v592
      %v634 = vunpack.c.l.b16 %v593
      %v635 = vunpack.c.l.b16 %v594
      %v636 = vunpack.c.l.b16 %v595
      %v637 = vunpack.c.l.b16 %v596
      %v638 = vunpack.c.l.b16 %v597
      %v639 = vunpack.c.l.b16 %v598
      %v640 = vpack.c.b16 %v625, %v624
      %v641 = vpack.c.b16 %v627, %v626
      %v642 = vpack.c.b16 %v629, %v628
      %v643 = vpack.c.b16 %v631, %v630
      %v644 = vpack.c.b16 %v633, %v632
      %v645 = vpack.c.b16 %v635, %v634
      %v646 = vpack.c.b16 %v637, %v636
      %v647 = vpack.c.b16 %v639, %v638
      %656 = vmatpush.bf16.msra.mxu0 %v647
      %657 = vmatpush.bf16.msra.mxu0 %v646
      %658 = vmatpush.bf16.msra.mxu0 %v645
      %659 = vmatpush.bf16.msra.mxu0 %v644
      %660 = vmatpush.bf16.msra.mxu0 %v643
      %661 = vmatpush.bf16.msra.mxu0 %v642
      %662 = vmatpush.bf16.msra.mxu0 %v641
      %663 = vmatpush.bf16.msra.mxu0 %v640
      %664 = vmatmul.bf16.gmra.mxu0 %v605
      %v665 = vpop.f32.mrf.mxu0
      %v666 = vadd.f32 0.0, %v665
      %v667 = vpop.f32.mrf.mxu0
      %v668 = vadd.f32 0.0, %v667
      %669 = vmatmul.bf16.gmra.mxu0 %v604
      %v670 = vpop.f32.mrf.mxu0
      %v671 = vadd.f32 0.0, %v670
      %v672 = vpop.f32.mrf.mxu0
      %v673 = vadd.f32 0.0, %v672
      %674 = vdwg.mxu0
      %v675 = vadd.f32 %v573, %v666
      %v676 = vadd.f32 %v575, %v668
      %v677 = vadd.f32 %v578, %v671
      %v678 = vadd.f32 %v580, %v673
      %v679 = vperm.slane %v173, 0
      %v680 = vadd.f32 %v675, %v679
      %v681 = vadd.f32 %v676, %v679
      %v682 = vadd.f32 %v677, %v679
      %v683 = vadd.f32 %v678, %v679
      %v684 = vmax.f32 %v680, 0.0
      %v685 = vmax.f32 %v681, 0.0
      %v686 = vmax.f32 %v682, 0.0
      %v687 = vmax.f32 %v683, 0.0
      %v688 = vpack.c.bf16 %v684, %v684
      %v689 = vpack.c.bf16 %v685, %v685
      %v690 = vpack.c.bf16 %v686, %v686
      %v691 = vpack.c.bf16 %v687, %v687
      %v695 = vunpack.c.l.b16 %v688
      %v696 = vunpack.c.l.b16 %v689
      %v697 = vunpack.c.l.b16 %v690
      %v698 = vpack.c.b16 %v696, %v695
      %v699 = vpack.c.b16 %v697, %v697
      %v703 = vunpack.c.l.b16 %v691
      %v704 = vpack.c.b16 %v703, %v697
      %v705 = vrot.slane %v698, 1
      %v706 = vrot.slane %v704, 1
      %v707 = vsel %vm303, %v705, %v706
      %v710 = vld [vmem:[%s1 + $0x140] sm:$0xf]
      %v711 = vld [vmem:[%s1 + $0x144] sm:$0xf]
      %v712 = vld [vmem:[%s1 + $0x148] sm:$0xf]
      %v713 = vld [vmem:[%s1 + $0x14c] sm:$0xf]
      %v714 = vld [vmem:[%s1 + $0x150] sm:$0xf]
      %v715 = vld [vmem:[%s1 + $0x154] sm:$0xf]
      %v716 = vld [vmem:[%s1 + $0x158] sm:$0xf]
      %v717 = vld [vmem:[%s1 + $0x15c] sm:$0xf]
      %v718 = vld [vmem:[%s1 + $0x160] sm:$0xf]
      %v719 = vld [vmem:[%s1 + $0x164] sm:$0xf]
      %v720 = vld [vmem:[%s1 + $0x168] sm:$0xf]
      %v721 = vld [vmem:[%s1 + $0x16c] sm:$0xf]
      %v722 = vld [vmem:[%s1 + $0x170] sm:$0xf]
      %v723 = vld [vmem:[%s1 + $0x174] sm:$0xf]
      %v724 = vld [vmem:[%s1 + $0x178] sm:$0xf]
      %v725 = vld [vmem:[%s1 + $0x17c] sm:$0xf]
      %v726 = vld [vmem:[%s1 + $0x180] sm:$0xf]
      %v727 = vld [vmem:[%s1 + $0x184] sm:$0xf]
      %v728 = vld [vmem:[%s1 + $0x188] sm:$0xf]
      %v729 = vld [vmem:[%s1 + $0x18c] sm:$0xf]
      %v730 = vld [vmem:[%s1 + $0x190] sm:$0xf]
      %v731 = vld [vmem:[%s1 + $0x194] sm:$0xf]
      %v732 = vld [vmem:[%s1 + $0x198] sm:$0xf]
      %v733 = vld [vmem:[%s1 + $0x19c] sm:$0xf]
      %v734 = vld [vmem:[%s1 + $0x1a0] sm:$0xf]
      %v735 = vld [vmem:[%s1 + $0x1a4] sm:$0xf]
      %v736 = vld [vmem:[%s1 + $0x1a8] sm:$0xf]
      %v737 = vld [vmem:[%s1 + $0x1ac] sm:$0xf]
      %v738 = vld [vmem:[%s1 + $0x1b0] sm:$0xf]
      %v739 = vld [vmem:[%s1 + $0x1b4] sm:$0xf]
      %v740 = vld [vmem:[%s1 + $0x1b8] sm:$0xf]
      %v741 = vld [vmem:[%s1 + $0x1bc] sm:$0xf]
      %v742 = vld [vmem:[%s1 + $0x1c0] sm:$0xf]
      %v743 = vld [vmem:[%s1 + $0x1c4] sm:$0xf]
      %v744 = vld [vmem:[%s1 + $0x1c8] sm:$0xf]
      %v745 = vld [vmem:[%s1 + $0x1cc] sm:$0xf]
      %v746 = vld [vmem:[%s1 + $0x1d0] sm:$0xf]
      %v747 = vld [vmem:[%s1 + $0x1d4] sm:$0xf]
      %v748 = vld [vmem:[%s1 + $0x1d8] sm:$0xf]
      %v749 = vld [vmem:[%s1 + $0x1dc] sm:$0xf]
      %v750 = vld [vmem:[%s1 + $0x1e0] sm:$0xf]
      %v751 = vld [vmem:[%s1 + $0x1e4] sm:$0xf]
      %v752 = vld [vmem:[%s1 + $0x1e8] sm:$0xf]
      %v753 = vld [vmem:[%s1 + $0x1ec] sm:$0xf]
      %v754 = vld [vmem:[%s1 + $0x1f0] sm:$0xf]
      %v755 = vld [vmem:[%s1 + $0x1f4] sm:$0xf]
      %v756 = vld [vmem:[%s1 + $0x1f8] sm:$0xf]
      %v757 = vld [vmem:[%s1 + $0x1fc] sm:$0xf]
      %v758 = vrot.slane %v698, 2
      %v759 = vrot.slane %v704, 2
      %v760 = vsel %vm602, %v758, %v759
      %v779 = vunpack.c.l.b16 %v742
      %v780 = vunpack.c.l.b16 %v743
      %v781 = vunpack.c.l.b16 %v744
      %v782 = vunpack.c.l.b16 %v745
      %v783 = vunpack.c.l.b16 %v746
      %v784 = vunpack.c.l.b16 %v747
      %v785 = vunpack.c.l.b16 %v748
      %v786 = vunpack.c.l.b16 %v749
      %v787 = vunpack.c.l.b16 %v750
      %v788 = vunpack.c.l.b16 %v751
      %v789 = vunpack.c.l.b16 %v752
      %v790 = vunpack.c.l.b16 %v753
      %v791 = vunpack.c.l.b16 %v754
      %v792 = vunpack.c.l.b16 %v755
      %v793 = vunpack.c.l.b16 %v756
      %v794 = vunpack.c.l.b16 %v757
      %v795 = vpack.c.b16 %v780, %v779
      %v796 = vpack.c.b16 %v782, %v781
      %v797 = vpack.c.b16 %v784, %v783
      %v798 = vpack.c.b16 %v786, %v785
      %v799 = vpack.c.b16 %v788, %v787
      %v800 = vpack.c.b16 %v790, %v789
      %v801 = vpack.c.b16 %v792, %v791
      %v802 = vpack.c.b16 %v794, %v793
      %811 = vmatpush.bf16.msra.mxu0 %v802
      %812 = vmatpush.bf16.msra.mxu0 %v801
      %813 = vmatpush.bf16.msra.mxu0 %v800
      %814 = vmatpush.bf16.msra.mxu0 %v799
      %815 = vmatpush.bf16.msra.mxu0 %v798
      %816 = vmatpush.bf16.msra.mxu0 %v797
      %817 = vmatpush.bf16.msra.mxu0 %v796
      %818 = vmatpush.bf16.msra.mxu0 %v795
      %819 = vmatmul.bf16.gmra.mxu0 %v760
      %v820 = vpop.f32.mrf.mxu0
      %v821 = vadd.f32 0.0, %v820
      %v822 = vpop.f32.mrf.mxu0
      %v823 = vadd.f32 0.0, %v822
      %824 = vmatmul.bf16.gmra.mxu0 %v759
      %v825 = vpop.f32.mrf.mxu0
      %v826 = vadd.f32 0.0, %v825
      %v827 = vpop.f32.mrf.mxu0
      %828 = vdwg.mxu0
      %v861 = vunpack.c.l.b16 %v710
      %v862 = vunpack.c.l.b16 %v711
      %v863 = vunpack.c.l.b16 %v712
      %v864 = vunpack.c.l.b16 %v713
      %v865 = vunpack.c.l.b16 %v714
      %v866 = vunpack.c.l.b16 %v715
      %v867 = vunpack.c.l.b16 %v716
      %v868 = vunpack.c.l.b16 %v717
      %v869 = vunpack.c.l.b16 %v718
      %v870 = vunpack.c.l.b16 %v719
      %v871 = vunpack.c.l.b16 %v720
      %v872 = vunpack.c.l.b16 %v721
      %v873 = vunpack.c.l.b16 %v722
      %v874 = vunpack.c.l.b16 %v723
      %v875 = vunpack.c.l.b16 %v724
      %v876 = vunpack.c.l.b16 %v725
      %v877 = vunpack.c.l.b16 %v726
      %v878 = vunpack.c.l.b16 %v727
      %v879 = vunpack.c.l.b16 %v728
      %v880 = vunpack.c.l.b16 %v729
      %v881 = vunpack.c.l.b16 %v730
      %v882 = vunpack.c.l.b16 %v731
      %v883 = vunpack.c.l.b16 %v732
      %v884 = vunpack.c.l.b16 %v733
      %v885 = vunpack.c.l.b16 %v734
      %v886 = vunpack.c.l.b16 %v735
      %v887 = vunpack.c.l.b16 %v736
      %v888 = vunpack.c.l.b16 %v737
      %v889 = vunpack.c.l.b16 %v738
      %v890 = vunpack.c.l.b16 %v739
      %v891 = vunpack.c.l.b16 %v740
      %v892 = vunpack.c.l.b16 %v741
      %v893 = vpack.c.b16 %v862, %v861
      %v894 = vpack.c.b16 %v864, %v863
      %v895 = vpack.c.b16 %v866, %v865
      %v896 = vpack.c.b16 %v868, %v867
      %v897 = vpack.c.b16 %v870, %v869
      %v898 = vpack.c.b16 %v872, %v871
      %v899 = vpack.c.b16 %v874, %v873
      %v900 = vpack.c.b16 %v876, %v875
      %v901 = vpack.c.b16 %v878, %v877
      %v902 = vpack.c.b16 %v880, %v879
      %v903 = vpack.c.b16 %v882, %v881
      %v904 = vpack.c.b16 %v884, %v883
      %v905 = vpack.c.b16 %v886, %v885
      %v906 = vpack.c.b16 %v888, %v887
      %v907 = vpack.c.b16 %v890, %v889
      %v908 = vpack.c.b16 %v892, %v891
      %925 = vmatpush.bf16.msra.mxu0 %v900
      %926 = vmatpush.bf16.msra.mxu0 %v899
      %927 = vmatpush.bf16.msra.mxu0 %v898
      %928 = vmatpush.bf16.msra.mxu0 %v897
      %929 = vmatpush.bf16.msra.mxu0 %v896
      %930 = vmatpush.bf16.msra.mxu0 %v895
      %931 = vmatpush.bf16.msra.mxu0 %v894
      %932 = vmatpush.bf16.msra.mxu0 %v893
      %933 = vmatmul.bf16.gmra.mxu0 %v698
      %v934 = vpop.f32.mrf.mxu0
      %v935 = vadd.f32 %v821, %v934
      %v936 = vpop.f32.mrf.mxu0
      %v937 = vadd.f32 %v823, %v936
      %938 = vmatmul.bf16.gmra.mxu0 %v699
      %v939 = vpop.f32.mrf.mxu0
      %v940 = vadd.f32 %v826, %v939
      %v941 = vpop.f32.mrf.mxu0
      %942 = vdwg.mxu0
      %943 = vmatpush.bf16.msra.mxu0 %v908
      %944 = vmatpush.bf16.msra.mxu0 %v907
      %945 = vmatpush.bf16.msra.mxu0 %v906
      %946 = vmatpush.bf16.msra.mxu0 %v905
      %947 = vmatpush.bf16.msra.mxu0 %v904
      %948 = vmatpush.bf16.msra.mxu0 %v903
      %949 = vmatpush.bf16.msra.mxu0 %v902
      %950 = vmatpush.bf16.msra.mxu0 %v901
      %951 = vmatmul.bf16.gmra.mxu0 %v707
      %v952 = vpop.f32.mrf.mxu0
      %v953 = vadd.f32 %v935, %v952
      %v954 = vpop.f32.mrf.mxu0
      %v955 = vadd.f32 %v937, %v954
      %956 = vmatmul.bf16.gmra.mxu0 %v706
      %v957 = vpop.f32.mrf.mxu0
      %v958 = vadd.f32 %v940, %v957
      %v959 = vpop.f32.mrf.mxu0
      %960 = vdwg.mxu0
      %v961 = vperm.slane %v174, 0
      %v962 = vadd.f32 %v953, %v961
      %v963 = vadd.f32 %v955, %v961
      %v964 = vadd.f32 %v958, %v961
      %v965 = vmax.f32 %v962, 0.0
      %v966 = vmax.f32 %v963, 0.0
      %v967 = vmax.f32 %v964, 0.0
      %v968 = vpack.c.bf16 %v965, %v965
      %v969 = vpack.c.bf16 %v966, %v966
      %v970 = vpack.c.bf16 %v967, %v967
      %v974 = vunpack.c.l.b16 %v968
      %v975 = vunpack.c.l.b16 %v969
      %v976 = vunpack.c.l.b16 %v970
      %v977 = vpack.c.b16 %v975, %v974
      %v978 = vpack.c.b16 %v976, %v976
      %vm981 = vsmask.f32 6400
      %v983 = vshrl.u32 %v977, 16
      %v985 = vrot.slane %v983, 1
      %v986 = vshll.u32 %v977, 16
      %v988 = vrot.slane %v986, 2
      %v989 = vor.u32 %v985, %v988
      %v991 = vshrl.u32 %v978, 16
      %v993 = vrot.slane %v991, 1
      %v994 = vshll.u32 %v978, 16
      %v996 = vrot.slane %v994, 2
      %v997 = vor.u32 %v993, %v996
      %v998 = vsel %vm981, %v989, %v997
      %v1001 = vld [vmem:[%s1 + $0x200] sm:$0xf]
      %v1002 = vld [vmem:[%s1 + $0x204] sm:$0xf]
      %v1003 = vld [vmem:[%s1 + $0x208] sm:$0xf]
      %v1004 = vld [vmem:[%s1 + $0x20c] sm:$0xf]
      %v1005 = vld [vmem:[%s1 + $0x210] sm:$0xf]
      %v1006 = vld [vmem:[%s1 + $0x214] sm:$0xf]
      %v1007 = vld [vmem:[%s1 + $0x218] sm:$0xf]
      %v1008 = vld [vmem:[%s1 + $0x21c] sm:$0xf]
      %v1009 = vld [vmem:[%s1 + $0x220] sm:$0xf]
      %v1010 = vld [vmem:[%s1 + $0x224] sm:$0xf]
      %v1011 = vld [vmem:[%s1 + $0x228] sm:$0xf]
      %v1012 = vld [vmem:[%s1 + $0x22c] sm:$0xf]
      %v1013 = vld [vmem:[%s1 + $0x230] sm:$0xf]
      %v1014 = vld [vmem:[%s1 + $0x234] sm:$0xf]
      %v1015 = vld [vmem:[%s1 + $0x238] sm:$0xf]
      %v1016 = vld [vmem:[%s1 + $0x23c] sm:$0xf]
      %v1017 = vld [vmem:[%s1 + $0x240] sm:$0xf]
      %v1018 = vld [vmem:[%s1 + $0x244] sm:$0xf]
      %v1019 = vld [vmem:[%s1 + $0x248] sm:$0xf]
      %v1020 = vld [vmem:[%s1 + $0x24c] sm:$0xf]
      %v1021 = vld [vmem:[%s1 + $0x250] sm:$0xf]
      %v1022 = vld [vmem:[%s1 + $0x254] sm:$0xf]
      %v1023 = vld [vmem:[%s1 + $0x258] sm:$0xf]
      %v1024 = vld [vmem:[%s1 + $0x25c] sm:$0xf]
      %v1025 = vld [vmem:[%s1 + $0x260] sm:$0xf]
      %v1026 = vld [vmem:[%s1 + $0x264] sm:$0xf]
      %v1027 = vld [vmem:[%s1 + $0x268] sm:$0xf]
      %v1028 = vld [vmem:[%s1 + $0x26c] sm:$0xf]
      %v1029 = vld [vmem:[%s1 + $0x270] sm:$0xf]
      %v1030 = vld [vmem:[%s1 + $0x274] sm:$0xf]
      %v1031 = vld [vmem:[%s1 + $0x278] sm:$0xf]
      %v1032 = vld [vmem:[%s1 + $0x27c] sm:$0xf]
      %v1033 = vld [vmem:[%s1 + $0x280] sm:$0xf]
      %v1034 = vld [vmem:[%s1 + $0x284] sm:$0xf]
      %v1035 = vld [vmem:[%s1 + $0x288] sm:$0xf]
      %v1036 = vld [vmem:[%s1 + $0x28c] sm:$0xf]
      %v1037 = vld [vmem:[%s1 + $0x290] sm:$0xf]
      %v1038 = vld [vmem:[%s1 + $0x294] sm:$0xf]
      %v1039 = vld [vmem:[%s1 + $0x298] sm:$0xf]
      %v1040 = vld [vmem:[%s1 + $0x29c] sm:$0xf]
      %v1041 = vld [vmem:[%s1 + $0x2a0] sm:$0xf]
      %v1042 = vld [vmem:[%s1 + $0x2a4] sm:$0xf]
      %v1043 = vld [vmem:[%s1 + $0x2a8] sm:$0xf]
      %v1044 = vld [vmem:[%s1 + $0x2ac] sm:$0xf]
      %v1045 = vld [vmem:[%s1 + $0x2b0] sm:$0xf]
      %v1046 = vld [vmem:[%s1 + $0x2b4] sm:$0xf]
      %v1047 = vld [vmem:[%s1 + $0x2b8] sm:$0xf]
      %v1048 = vld [vmem:[%s1 + $0x2bc] sm:$0xf]
      %vm1049 = vcmask 1044480
      %v1050 = vrot.slane %v977, 3
      %v1051 = vrot.slane %v978, 3
      %v1052 = vsel %vm1049, %v1050, %v1051
      %v1071 = vunpack.c.l.b16 %v1033
      %v1072 = vunpack.c.l.b16 %v1034
      %v1073 = vunpack.c.l.b16 %v1035
      %v1074 = vunpack.c.l.b16 %v1036
      %v1075 = vunpack.c.l.b16 %v1037
      %v1076 = vunpack.c.l.b16 %v1038
      %v1077 = vunpack.c.l.b16 %v1039
      %v1078 = vunpack.c.l.b16 %v1040
      %v1079 = vunpack.c.l.b16 %v1041
      %v1080 = vunpack.c.l.b16 %v1042
      %v1081 = vunpack.c.l.b16 %v1043
      %v1082 = vunpack.c.l.b16 %v1044
      %v1083 = vunpack.c.l.b16 %v1045
      %v1084 = vunpack.c.l.b16 %v1046
      %v1085 = vunpack.c.l.b16 %v1047
      %v1086 = vunpack.c.l.b16 %v1048
      %v1087 = vpack.c.b16 %v1072, %v1071
      %v1088 = vpack.c.b16 %v1074, %v1073
      %v1089 = vpack.c.b16 %v1076, %v1075
      %v1090 = vpack.c.b16 %v1078, %v1077
      %v1091 = vpack.c.b16 %v1080, %v1079
      %v1092 = vpack.c.b16 %v1082, %v1081
      %v1093 = vpack.c.b16 %v1084, %v1083
      %v1094 = vpack.c.b16 %v1086, %v1085
      %1103 = vmatpush.bf16.msra.mxu0 %v1094
      %1104 = vmatpush.bf16.msra.mxu0 %v1093
      %1105 = vmatpush.bf16.msra.mxu0 %v1092
      %1106 = vmatpush.bf16.msra.mxu0 %v1091
      %1107 = vmatpush.bf16.msra.mxu0 %v1090
      %1108 = vmatpush.bf16.msra.mxu0 %v1089
      %1109 = vmatpush.bf16.msra.mxu0 %v1088
      %1110 = vmatpush.bf16.msra.mxu0 %v1087
      %1111 = vmatmul.bf16.gmra.mxu0 %v1052
      %v1112 = vpop.f32.mrf.mxu0
      %v1113 = vadd.f32 0.0, %v1112
      %v1114 = vpop.f32.mrf.mxu0
      %v1115 = vadd.f32 0.0, %v1114
      %1116 = vmatmul.bf16.gmra.mxu0 %v1051
      %v1117 = vpop.f32.mrf.mxu0
      %v1118 = vpop.f32.mrf.mxu0
      %1119 = vdwg.mxu0
      %v1152 = vunpack.c.l.b16 %v1001
      %v1153 = vunpack.c.l.b16 %v1002
      %v1154 = vunpack.c.l.b16 %v1003
      %v1155 = vunpack.c.l.b16 %v1004
      %v1156 = vunpack.c.l.b16 %v1005
      %v1157 = vunpack.c.l.b16 %v1006
      %v1158 = vunpack.c.l.b16 %v1007
      %v1159 = vunpack.c.l.b16 %v1008
      %v1160 = vunpack.c.l.b16 %v1009
      %v1161 = vunpack.c.l.b16 %v1010
      %v1162 = vunpack.c.l.b16 %v1011
      %v1163 = vunpack.c.l.b16 %v1012
      %v1164 = vunpack.c.l.b16 %v1013
      %v1165 = vunpack.c.l.b16 %v1014
      %v1166 = vunpack.c.l.b16 %v1015
      %v1167 = vunpack.c.l.b16 %v1016
      %v1168 = vunpack.c.l.b16 %v1017
      %v1169 = vunpack.c.l.b16 %v1018
      %v1170 = vunpack.c.l.b16 %v1019
      %v1171 = vunpack.c.l.b16 %v1020
      %v1172 = vunpack.c.l.b16 %v1021
      %v1173 = vunpack.c.l.b16 %v1022
      %v1174 = vunpack.c.l.b16 %v1023
      %v1175 = vunpack.c.l.b16 %v1024
      %v1176 = vunpack.c.l.b16 %v1025
      %v1177 = vunpack.c.l.b16 %v1026
      %v1178 = vunpack.c.l.b16 %v1027
      %v1179 = vunpack.c.l.b16 %v1028
      %v1180 = vunpack.c.l.b16 %v1029
      %v1181 = vunpack.c.l.b16 %v1030
      %v1182 = vunpack.c.l.b16 %v1031
      %v1183 = vunpack.c.l.b16 %v1032
      %v1184 = vpack.c.b16 %v1153, %v1152
      %v1185 = vpack.c.b16 %v1155, %v1154
      %v1186 = vpack.c.b16 %v1157, %v1156
      %v1187 = vpack.c.b16 %v1159, %v1158
      %v1188 = vpack.c.b16 %v1161, %v1160
      %v1189 = vpack.c.b16 %v1163, %v1162
      %v1190 = vpack.c.b16 %v1165, %v1164
      %v1191 = vpack.c.b16 %v1167, %v1166
      %v1192 = vpack.c.b16 %v1169, %v1168
      %v1193 = vpack.c.b16 %v1171, %v1170
      %v1194 = vpack.c.b16 %v1173, %v1172
      %v1195 = vpack.c.b16 %v1175, %v1174
      %v1196 = vpack.c.b16 %v1177, %v1176
      %v1197 = vpack.c.b16 %v1179, %v1178
      %v1198 = vpack.c.b16 %v1181, %v1180
      %v1199 = vpack.c.b16 %v1183, %v1182
      %1216 = vmatpush.bf16.msra.mxu0 %v1191
      %1217 = vmatpush.bf16.msra.mxu0 %v1190
      %1218 = vmatpush.bf16.msra.mxu0 %v1189
      %1219 = vmatpush.bf16.msra.mxu0 %v1188
      %1220 = vmatpush.bf16.msra.mxu0 %v1187
      %1221 = vmatpush.bf16.msra.mxu0 %v1186
      %1222 = vmatpush.bf16.msra.mxu0 %v1185
      %1223 = vmatpush.bf16.msra.mxu0 %v1184
      %1224 = vmatmul.bf16.gmra.mxu0 %v977
      %v1225 = vpop.f32.mrf.mxu0
      %v1226 = vadd.f32 %v1113, %v1225
      %v1227 = vpop.f32.mrf.mxu0
      %v1228 = vadd.f32 %v1115, %v1227
      %1229 = vmatmul.bf16.gmra.mxu0 %v978
      %v1230 = vpop.f32.mrf.mxu0
      %v1231 = vpop.f32.mrf.mxu0
      %1232 = vdwg.mxu0
      %1233 = vmatpush.bf16.msra.mxu0 %v1199
      %1234 = vmatpush.bf16.msra.mxu0 %v1198
      %1235 = vmatpush.bf16.msra.mxu0 %v1197
      %1236 = vmatpush.bf16.msra.mxu0 %v1196
      %1237 = vmatpush.bf16.msra.mxu0 %v1195
      %1238 = vmatpush.bf16.msra.mxu0 %v1194
      %1239 = vmatpush.bf16.msra.mxu0 %v1193
      %1240 = vmatpush.bf16.msra.mxu0 %v1192
      %1241 = vmatmul.bf16.gmra.mxu0 %v998
      %v1242 = vpop.f32.mrf.mxu0
      %v1243 = vadd.f32 %v1226, %v1242
      %v1244 = vpop.f32.mrf.mxu0
      %v1245 = vadd.f32 %v1228, %v1244
      %1246 = vmatmul.bf16.gmra.mxu0 %v997
      %v1247 = vpop.f32.mrf.mxu0
      %v1248 = vpop.f32.mrf.mxu0
      %1249 = vdwg.mxu0
      %v1250 = vperm.slane %v175, 0
      %v1251 = vadd.f32 %v1243, %v1250
      %v1252 = vadd.f32 %v1245, %v1250
      %v1253 = vmax.f32 %v1251, 0.0
      %v1254 = vmax.f32 %v1252, 0.0
      %v1255 = vperm.slane %v176, 0
      %v1256 = vmul.f32 %v1253, %v1255
      %v1257 = vmul.f32 %v1254, %v1255
      %v1258 = vperm.slane %v177, 0
      %v1259 = vadd.f32 %v1256, %v1258
      %v1260 = vadd.f32 %v1257, %v1258
      %1261 = vst [vmem:[%s172] sm:$0xff] %v1259
      %1262 = vst [vmem:[%s172 + $0x8] sm:$0xff] %v1260
      %v1263 = vmul.f32 %v1259, %v1259
      %v1264 = vmul.f32 %v1260, %v1260
      %s1265 = scalar_lea.vmem %s172, 128
      %1266 = vst [vmem:[%s1265] sm:$0xff] %v1263
      %1267 = vst [vmem:[%s1265 + $0x8] sm:$0xff] %v1264
      %1268 = vst [vmem:[%s172 + $0x10] sm:$0xff] 0.0
      %1269 = vst [vmem:[%s172 + $0x18] sm:$0xff] 0.0
      %1270 = vst [vmem:[%s172 + $0x20] sm:$0xff] 0.0
      %1271 = vst [vmem:[%s172 + $0x28] sm:$0xff] 0.0
      %1272 = vst [vmem:[%s172 + $0x30] sm:$0xff] 0.0
      %1273 = vst [vmem:[%s172 + $0x38] sm:$0xff] 0.0
      %1274 = vst [vmem:[%s172 + $0x40] sm:$0xff] 0.0
      %1275 = vst [vmem:[%s172 + $0x48] sm:$0xff] 0.0
      %1276 = vst [vmem:[%s172 + $0x50] sm:$0xff] 0.0
      %1277 = vst [vmem:[%s172 + $0x58] sm:$0xff] 0.0
      %1278 = vst [vmem:[%s172 + $0x60] sm:$0xff] 0.0
      %1279 = vst [vmem:[%s172 + $0x68] sm:$0xff] 0.0
      %1280 = vst [vmem:[%s172 + $0x70] sm:$0xff] 0.0
      %1281 = vst [vmem:[%s172 + $0x78] sm:$0xff] 0.0
      %1282 = vst [vmem:[%s1265 + $0x10] sm:$0xff] 0.0
      %1283 = vst [vmem:[%s1265 + $0x18] sm:$0xff] 0.0
      %1284 = vst [vmem:[%s1265 + $0x20] sm:$0xff] 0.0
      %1285 = vst [vmem:[%s1265 + $0x28] sm:$0xff] 0.0
      %1286 = vst [vmem:[%s1265 + $0x30] sm:$0xff] 0.0
      %1287 = vst [vmem:[%s1265 + $0x38] sm:$0xff] 0.0
      %1288 = vst [vmem:[%s1265 + $0x40] sm:$0xff] 0.0
      %1289 = vst [vmem:[%s1265 + $0x48] sm:$0xff] 0.0
      %1290 = vst [vmem:[%s1265 + $0x50] sm:$0xff] 0.0
      %1291 = vst [vmem:[%s1265 + $0x58] sm:$0xff] 0.0
      %1292 = vst [vmem:[%s1265 + $0x60] sm:$0xff] 0.0
      %1293 = vst [vmem:[%s1265 + $0x68] sm:$0xff] 0.0
      %1294 = vst [vmem:[%s1265 + $0x70] sm:$0xff] 0.0
      %1295 = vst [vmem:[%s1265 + $0x78] sm:$0xff] 0.0
      %p1296 = scmp.lt.s32.totalorder %s14, 1
      %s1297 = scalar_select %p1296, %s14, 1
      %s1298 = smul.addr %s1297, 32
      %s1299 = smul.addr %s1298, 8
      %s1300 = scalar_lea.vmem %s3, %s1299
      // Predicated region
      $region33: #{pallas_model_forward.2} parent=31 // pred_check
        %p1301 = pneg %p100
      $region34: #{pallas_model_forward.2} parent=31 // pred_check_branch
        %1303 = sbr.rel (%p1301) target = $region36
      $region35: #{pallas_model_forward.2} parent=31 // pred_region
        _
      $region36: #{pallas_model_forward.2} parent=31 // pred_fallthru
        _
    $region32: #{pallas_model_forward.2} parent=5 // pred_fallthru
      _
    %p1304 = scmp.le.s32.totalorder 2, %s9
    // Predicated region
    $region37: #{pallas_model_forward.2} parent=5 // pred_check
      %p1305 = pneg %p1304
    $region38: #{pallas_model_forward.2} parent=5 // pred_check_branch
      %1307 = sbr.rel (%p1305) target = $region40
    $region39: #{pallas_model_forward.2} parent=5 // pred_region
      %s1308 = ssub.s32 %s9, 2
      // Predicated region
      $region41: #{pallas_model_forward.2} parent=39 // pred_check
        %p1309 = pneg %p106
      $region42: #{pallas_model_forward.2} parent=39 // pred_check_branch
        %1311 = sbr.rel (%p1309) target = $region44
      $region43: #{pallas_model_forward.2} parent=39 // pred_region
        %p1312 = scmp.lt.s32.totalorder %s15, 1
        %s1313 = scalar_select %p1312, %s15, 1
        %s1314 = smul.addr %s1313, 32
        %s1315 = smul.addr %s1314, 8
        %s1316 = scalar_lea.vmem %s3, %s1315
      $region44: #{pallas_model_forward.2} parent=39 // pred_fallthru
        _
    $region40: #{pallas_model_forward.2} parent=5 // pred_fallthru
      _
  $region6: #{pallas_model_forward.2} parent=0 // loop_footer
    %s13 = sadd.s32 1, %s9
  $region7: #{pallas_model_forward.2} parent=0 // loop_footer_branch
    %8 = sbr.rel target = $region3
  $region8: #{pallas_model_forward.2} parent=0 // loop_exit
    _

// kernel: pallas_model_forward.3
$region0: #{pallas_model_forward.3}
  #allocation0 [shape = 'u32[]', space=smem, size = 0x4, offset = 0x4, fixed_abs, tag = 'smem constant byte address 0x4 - core index']
  #allocation1 [shape = 'u32[72,128]{1,0:T(1,128)}', space=vmem, size = 0x9000, scoped, tag = 'internal scratch']
  %s0 = inlined_call_operand.vmem [shape: f32[2,128], index: 0, kind: input, shape index: {}]
  %s1 = inlined_call_operand.vmem [shape: f32[2,128], index: 1, kind: input, shape index: {}]
  %s2 = inlined_call_operand.vmem [shape: f32[128,128], index: 2, kind: input, shape index: {}]
  %s3 = inlined_call_operand.vmem [shape: f32[128,128], index: 3, kind: input, shape index: {}]
  %s4 = inlined_call_operand.vmem [shape: f32[128,128], index: 4, kind: input, shape index: {}]
  %s5 = inlined_call_operand.vmem [shape: f32[128,128], index: 5, kind: input, shape index: {}]
  %s6 = inlined_call_operand.vmem [shape: f32[8,128], index: 6, kind: input, shape index: {}]
  %s7 = inlined_call_operand.hbm [shape: f32[2,128], index: 7, kind: output, shape index: {}]
  %s8 = sld [smem:[#allocation0]]
  $region38: #{pallas_model_forward.3} parent=0
    _
  %s10 = ssub.s32 1, %s8
  %s11 = scalar_select 0, %s10, %s8
  $region1: #{pallas_model_forward.3} parent=0
    #allocation2 [shape = 'u8[1024]{0}', space=vmem, size = 0x400, scoped, tag = 'output window, operand 0, single buffered']
    #allocation3 [shape = 's32[1]{0}', space=sflag, size = 0x4, scoped, tag = 'scoped memory for pallas_model_forward.3']
    %12 = vsyncpa [#allocation3], 0
    // Predicated region
    $region2: #{pallas_model_forward.3} parent=1 // pred_check
      _
    $region3: #{pallas_model_forward.3} parent=1 // pred_check_branch
      %14 = sbr.rel (0) target = $region5
    $region4: #{pallas_model_forward.3} parent=1 // pred_region
      _
    $region5: #{pallas_model_forward.3} parent=1 // pred_fallthru
      _
    // Predicated region
    $region6: #{pallas_model_forward.3} parent=1 // pred_check
      _
    $region7: #{pallas_model_forward.3} parent=1 // pred_check_branch
      %16 = sbr.rel (0) target = $region9
    $region8: #{pallas_model_forward.3} parent=1 // pred_region
      _
    $region9: #{pallas_model_forward.3} parent=1 // pred_fallthru
      _
    // Predicated region
    $region10: #{pallas_model_forward.3} parent=1 // pred_check
      _
    $region11: #{pallas_model_forward.3} parent=1 // pred_check_branch
      %18 = sbr.rel (0) target = $region13
    $region12: #{pallas_model_forward.3} parent=1 // pred_region
      _
    $region13: #{pallas_model_forward.3} parent=1 // pred_fallthru
      _
    // Predicated region
    $region14: #{pallas_model_forward.3} parent=1 // pred_check
      _
    $region15: #{pallas_model_forward.3} parent=1 // pred_check_branch
      %20 = sbr.rel (0) target = $region17
    $region16: #{pallas_model_forward.3} parent=1 // pred_region
      _
    $region17: #{pallas_model_forward.3} parent=1 // pred_fallthru
      _
    // Predicated region
    $region18: #{pallas_model_forward.3} parent=1 // pred_check
      _
    $region19: #{pallas_model_forward.3} parent=1 // pred_check_branch
      %22 = sbr.rel (0) target = $region21
    $region20: #{pallas_model_forward.3} parent=1 // pred_region
      _
    $region21: #{pallas_model_forward.3} parent=1 // pred_fallthru
      _
    // Predicated region
    $region22: #{pallas_model_forward.3} parent=1 // pred_check
      _
    $region23: #{pallas_model_forward.3} parent=1 // pred_check_branch
      %24 = sbr.rel (0) target = $region25
    $region24: #{pallas_model_forward.3} parent=1 // pred_region
      _
    $region25: #{pallas_model_forward.3} parent=1 // pred_fallthru
      _
    // Predicated region
    $region26: #{pallas_model_forward.3} parent=1 // pred_check
      _
    $region27: #{pallas_model_forward.3} parent=1 // pred_check_branch
      %26 = sbr.rel (0) target = $region29
    $region28: #{pallas_model_forward.3} parent=1 // pred_region
      _
    $region29: #{pallas_model_forward.3} parent=1 // pred_fallthru
      _
    %v27 = vld [vmem:[%s0] sm:$0x3]
    %v28 = vld [vmem:[%s1] sm:$0x3]
    %v29 = vmul.f32 %v27, 0.0625
    %v30 = vmul.f32 %v27, %v29
    %v31 = vsub.f32 %v28, %v30
    %v32 = vmax.f32 %v31, 0.0
    %v33 = vmul.f32 %v32, 0.06666667
    %v34 = vrsqrt.pop %v33
    %v35 = vmul.f32 %v34, %v33
    %v36 = vmul.f32 %v35, %v34
    %v37 = vmul.f32 0.5, %v36
    %v38 = vsub.f32 1.5, %v37
    %v39 = vmul.f32 %v34, %v38
    %v40 = vmul.f32 %v33, %v39
    %vm41 = vcmp.eq.f32.partialorder %v33, inf
    %v42 = vsel %vm41, %v33, %v40
    %vm43 = vcmp.eq.f32.partialorder %v33, 0.0
    %v44 = vand.u32 %v33, 2147483648
    %v45 = vsel %vm43, %v44, %v42
    %v46 = vld [vmem:[%s6] sm:$0x1]
    %v47 = vld [vmem:[%s6 + $0x1] sm:$0x1]
    %v48 = vld [vmem:[%s6 + $0x2] sm:$0x1]
    %v49 = vld [vmem:[%s6 + $0x3] sm:$0x1]
    %v50 = vld [vmem:[%s6 + $0x4] sm:$0x1]
    %v51 = vld [vmem:[%s6 + $0x5] sm:$0x1]
    %v52 = vld [vmem:[%s6 + $0x6] sm:$0x1]
    %v53 = vld [vmem:[%s2] sm:$0xff]
    %v54 = vld [vmem:[%s2 + $0x8] sm:$0xff]
    %v55 = vld [vmem:[%s2 + $0x10] sm:$0xff]
    %v56 = vld [vmem:[%s2 + $0x18] sm:$0xff]
    %v57 = vld [vmem:[%s2 + $0x20] sm:$0xff]
    %v58 = vld [vmem:[%s2 + $0x28] sm:$0xff]
    %v59 = vld [vmem:[%s2 + $0x30] sm:$0xff]
    %v60 = vld [vmem:[%s2 + $0x38] sm:$0xff]
    %v61 = vld [vmem:[%s2 + $0x40] sm:$0xff]
    %v62 = vld [vmem:[%s2 + $0x48] sm:$0xff]
    %v63 = vld [vmem:[%s2 + $0x50] sm:$0xff]
    %v64 = vld [vmem:[%s2 + $0x58] sm:$0xff]
    %v65 = vld [vmem:[%s2 + $0x60] sm:$0xff]
    %v66 = vld [vmem:[%s2 + $0x68] sm:$0xff]
    %v67 = vld [vmem:[%s2 + $0x70] sm:$0xff]
    %v68 = vld [vmem:[%s2 + $0x78] sm:$0xff]
    %v69 = vld [vmem:[%s3] sm:$0xff]
    %v70 = vld [vmem:[%s3 + $0x8] sm:$0xff]
    %v71 = vld [vmem:[%s3 + $0x10] sm:$0xff]
    %v72 = vld [vmem:[%s3 + $0x18] sm:$0xff]
    %v73 = vld [vmem:[%s3 + $0x20] sm:$0xff]
    %v74 = vld [vmem:[%s3 + $0x28] sm:$0xff]
    %v75 = vld [vmem:[%s3 + $0x30] sm:$0xff]
    %v76 = vld [vmem:[%s3 + $0x38] sm:$0xff]
    %v77 = vld [vmem:[%s3 + $0x40] sm:$0xff]
    %v78 = vld [vmem:[%s3 + $0x48] sm:$0xff]
    %v79 = vld [vmem:[%s3 + $0x50] sm:$0xff]
    %v80 = vld [vmem:[%s3 + $0x58] sm:$0xff]
    %v81 = vld [vmem:[%s3 + $0x60] sm:$0xff]
    %v82 = vld [vmem:[%s3 + $0x68] sm:$0xff]
    %v83 = vld [vmem:[%s3 + $0x70] sm:$0xff]
    %v84 = vld [vmem:[%s3 + $0x78] sm:$0xff]
    %85 = vmatpush.msra.mxu0 %v84
    %86 = vmatpush.msra.mxu0 %v83
    %87 = vmatpush.msra.mxu0 %v82
    %88 = vmatpush.msra.mxu0 %v81
    %89 = vmatpush.msra.mxu0 %v80
    %90 = vmatpush.msra.mxu0 %v79
    %91 = vmatpush.msra.mxu0 %v78
    %92 = vmatpush.msra.mxu0 %v77
    %93 = vmatpush.msra.mxu0 %v76
    %94 = vmatpush.msra.mxu0 %v75
    %95 = vmatpush.msra.mxu0 %v74
    %96 = vmatpush.msra.mxu0 %v73
    %97 = vmatpush.msra.mxu0 %v72
    %98 = vmatpush.msra.mxu0 %v71
    %99 = vmatpush.msra.mxu0 %v70
    %100 = vmatpush.msra.mxu0 %v69
    %101 = vmatmul.f32.gmra.mxu0 %v45
    %v102 = vpop.f32.mrf.mxu0
    %v103 = vadd.f32 0.0, %v102
    %104 = vdwg.mxu0
    %105 = vmatpush.msra.mxu0 %v68
    %106 = vmatpush.msra.mxu0 %v67
    %107 = vmatpush.msra.mxu0 %v66
    %108 = vmatpush.msra.mxu0 %v65
    %109 = vmatpush.msra.mxu0 %v64
    %110 = vmatpush.msra.mxu0 %v63
    %111 = vmatpush.msra.mxu0 %v62
    %112 = vmatpush.msra.mxu0 %v61
    %113 = vmatpush.msra.mxu0 %v60
    %114 = vmatpush.msra.mxu0 %v59
    %115 = vmatpush.msra.mxu0 %v58
    %116 = vmatpush.msra.mxu0 %v57
    %117 = vmatpush.msra.mxu0 %v56
    %118 = vmatpush.msra.mxu0 %v55
    %119 = vmatpush.msra.mxu0 %v54
    %120 = vmatpush.msra.mxu0 %v53
    %121 = vmatmul.f32.gmra.mxu0 %v29
    %v122 = vpop.f32.mrf.mxu0
    %v123 = vadd.f32 %v103, %v122
    %124 = vdwg.mxu0
    %v125 = vperm.slane %v46, 0
    %v126 = vadd.f32 %v123, %v125
    %v127 = vmax.f32 %v126, 0.0
    %v128 = vperm.slane %v47, 0
    %v129 = vmul.f32 %v127, %v128
    %v130 = vperm.slane %v48, 0
    %v131 = vadd.f32 %v129, %v130
    %v132 = vld [vmem:[%s4] sm:$0xff]
    %v133 = vld [vmem:[%s4 + $0x8] sm:$0xff]
    %v134 = vld [vmem:[%s4 + $0x10] sm:$0xff]
    %v135 = vld [vmem:[%s4 + $0x18] sm:$0xff]
    %v136 = vld [vmem:[%s4 + $0x20] sm:$0xff]
    %v137 = vld [vmem:[%s4 + $0x28] sm:$0xff]
    %v138 = vld [vmem:[%s4 + $0x30] sm:$0xff]
    %v139 = vld [vmem:[%s4 + $0x38] sm:$0xff]
    %v140 = vld [vmem:[%s4 + $0x40] sm:$0xff]
    %v141 = vld [vmem:[%s4 + $0x48] sm:$0xff]
    %v142 = vld [vmem:[%s4 + $0x50] sm:$0xff]
    %v143 = vld [vmem:[%s4 + $0x58] sm:$0xff]
    %v144 = vld [vmem:[%s4 + $0x60] sm:$0xff]
    %v145 = vld [vmem:[%s4 + $0x68] sm:$0xff]
    %v146 = vld [vmem:[%s4 + $0x70] sm:$0xff]
    %v147 = vld [vmem:[%s4 + $0x78] sm:$0xff]
    %v148 = vperm.slane %v49, 0
    %149 = vmatpush.msra.mxu0 %v147
    %150 = vmatpush.msra.mxu0 %v146
    %151 = vmatpush.msra.mxu0 %v145
    %152 = vmatpush.msra.mxu0 %v144
    %153 = vmatpush.msra.mxu0 %v143
    %154 = vmatpush.msra.mxu0 %v142
    %155 = vmatpush.msra.mxu0 %v141
    %156 = vmatpush.msra.mxu0 %v140
    %157 = vmatpush.msra.mxu0 %v139
    %158 = vmatpush.msra.mxu0 %v138
    %159 = vmatpush.msra.mxu0 %v137
    %160 = vmatpush.msra.mxu0 %v136
    %161 = vmatpush.msra.mxu0 %v135
    %162 = vmatpush.msra.mxu0 %v134
    %163 = vmatpush.msra.mxu0 %v133
    %164 = vmatpush.msra.mxu0 %v132
    %165 = vmatmul.f32.gmra.mxu0 %v131
    %v166 = vpop.f32.mrf.mxu0
    %v167 = vadd.f32 %v148, %v166
    %168 = vdwg.mxu0
    %v169 = vmax.f32 %v167, 0.0
    %v170 = vperm.slane %v50, 0
    %v171 = vmul.f32 %v169, %v170
    %v172 = vperm.slane %v51, 0
    %v173 = vadd.f32 %v171, %v172
    %v174 = vld [vmem:[%s5] sm:$0xff]
    %v175 = vld [vmem:[%s5 + $0x8] sm:$0xff]
    %v176 = vld [vmem:[%s5 + $0x10] sm:$0xff]
    %v177 = vld [vmem:[%s5 + $0x18] sm:$0xff]
    %v178 = vld [vmem:[%s5 + $0x20] sm:$0xff]
    %v179 = vld [vmem:[%s5 + $0x28] sm:$0xff]
    %v180 = vld [vmem:[%s5 + $0x30] sm:$0xff]
    %v181 = vld [vmem:[%s5 + $0x38] sm:$0xff]
    %v182 = vld [vmem:[%s5 + $0x40] sm:$0xff]
    %v183 = vld [vmem:[%s5 + $0x48] sm:$0xff]
    %v184 = vld [vmem:[%s5 + $0x50] sm:$0xff]
    %v185 = vld [vmem:[%s5 + $0x58] sm:$0xff]
    %v186 = vld [vmem:[%s5 + $0x60] sm:$0xff]
    %v187 = vld [vmem:[%s5 + $0x68] sm:$0xff]
    %v188 = vld [vmem:[%s5 + $0x70] sm:$0xff]
    %v189 = vld [vmem:[%s5 + $0x78] sm:$0xff]
    %v190 = vperm.slane %v52, 0
    %191 = vmatpush.msra.mxu0 %v189
    %192 = vmatpush.msra.mxu0 %v188
    %193 = vmatpush.msra.mxu0 %v187
    %194 = vmatpush.msra.mxu0 %v186
    %195 = vmatpush.msra.mxu0 %v185
    %196 = vmatpush.msra.mxu0 %v184
    %197 = vmatpush.msra.mxu0 %v183
    %198 = vmatpush.msra.mxu0 %v182
    %199 = vmatpush.msra.mxu0 %v181
    %200 = vmatpush.msra.mxu0 %v180
    %201 = vmatpush.msra.mxu0 %v179
    %202 = vmatpush.msra.mxu0 %v178
    %203 = vmatpush.msra.mxu0 %v177
    %204 = vmatpush.msra.mxu0 %v176
    %205 = vmatpush.msra.mxu0 %v175
    %206 = vmatpush.msra.mxu0 %v174
    %207 = vmatmul.f32.gmra.mxu0 %v173
    %v208 = vpop.f32.mrf.mxu0
    %v209 = vadd.f32 %v190, %v208
    %210 = vdwg.mxu0
    %v211 = vlaneseq
    %v212 = vand.u32 %v211, 127
    %vm213 = vcmp.lt.s32.totalorder %v212, 2
    %v214 = vsel %vm213, %v209, -1e+30
    %vm215 = vcmask 1041408
    %v216 = vsel %vm215, %v214, -inf
    %217 = vmax.xlane.f32.xlu0 %v216
    %v218 = vpop.xlane.xlu0 %217
    %v219 = vsub.f32 %v214, %v218
    %v220 = vmul.f32 %v219, 1.442695
    %v221 = vpow.pop %v220
    %v222 = vsel %vm213, %v221, 0.0
    %v223 = vsel %vm215, %v222, 0.0
    %224 = vadd.xlane.f32.xlu0 %v223
    %v225 = vpop.xlane.xlu0 %224
    %v226 = vlog2.pop %v225
    %v227 = vmul.f32 %v226, 0.6931472
    %v228 = vadd.f32 %v227, %v218
    %v229 = vsub.f32 %v209, %v228
    %v230 = vsel %vm213, %v229, 0.0
    %231 = vst [vmem:[#allocation2] sm:$0x3] %v230
    // Predicated region
    $region30: #{pallas_model_forward.3} parent=1 // pred_check
      _
    $region31: #{pallas_model_forward.3} parent=1 // pred_check_branch
      %233 = sbr.rel (0) target = $region33
    $region32: #{pallas_model_forward.3} parent=1 // pred_region
      %235 = vsyncadd [#allocation3], 0
      %s237 = sshll.u32 [#allocation2], 4
      %s238 = int_to_ptr.vmem [resolvable:$true] %s237
      %s239 = sshll.u32 %s7, 4
      %s240 = int_to_ptr.hbm [resolvable:$true] %s239
      %242 = dma.vmem_to_hbm [thread:$0]  %s238, 32, %s240, [#allocation3]
    $region33: #{pallas_model_forward.3} parent=1 // pred_fallthru
      _
    // Predicated region
    $region34: #{pallas_model_forward.3} parent=1 // pred_check
      _
    $region35: #{pallas_model_forward.3} parent=1 // pred_check_branch
      %244 = sbr.rel (0) target = $region37
    $region36: #{pallas_model_forward.3} parent=1 // pred_region
      %246 = dma.done [#allocation3], 32
    $region37: #{pallas_model_forward.3} parent=1 // pred_fallthru
      _
    %247 = vsyncpa [#allocation3], 1

</llo_original>
